<compile_context>
chip_gen: v7x
topology: tpu7x:2x2x1
jax: 0.10.0
libtpu: 0.0.40
codegen_flags: <defaults>
</compile_context>

<pallas_src>
import functools

import jax
import jax.numpy as jnp
from jax import lax
from jax.experimental import pallas as pl
from jax.experimental.pallas import tpu as pltpu

EPS = 1e-5    # nn.LayerNorm default eps
LANE = 128


def _round_up(x, m):
    return (x + m - 1) // m * m


# ------------------------------ fused kernel ------------------------------- #

def _down_block_kernel(p_ref, w1_ref, b1_ref, w2_ref, b2_ref, g_ref, bt_ref,
                       o_ref, y1p_ref, *, ho, wo, cout):
    """One image per grid step: down-conv -> res-conv -> LayerNorm2d -> SiLU -> add."""
    rows = ho * wo
    cpad = o_ref.shape[-1]

    # -- stage 1: stride-2 3x3 conv as a single bf16 MXU matmul on im2col patches
    y1 = jnp.dot(p_ref[0], w1_ref[...], preferred_element_type=jnp.float32)
    y1 = y1 + b1_ref[...]                                    # (rows, cpad) f32

    # -- stage 2: stride-1 3x3 conv on the VMEM-resident y1 (9 shifted matmuls,
    #    no HBM im2col of y1).  Padded lanes of y1 are exactly zero.
    # TODO(synk): nn.Dropout is eval-mode identity (no masking) in this kernel.
    y1p_ref[...] = jnp.zeros_like(y1p_ref)                   # zero halo
    y1p_ref[1:ho + 1, 1:wo + 1, :] = y1.reshape(ho, wo, cpad)
    acc = jnp.zeros((rows, cpad), jnp.float32)
    for kh in range(3):
        for kw in range(3):
            tap = y1p_ref[kh:kh + ho, kw:kw + wo, :]
            tap = tap.reshape(rows, cpad).astype(jnp.bfloat16)
            acc = acc + jnp.dot(tap, w2_ref[kh * 3 + kw],
                                preferred_element_type=jnp.float32)
    h = acc + b2_ref[...]                                    # (rows, cpad) f32

    # -- LayerNorm2d over the (real) channel axis.  Padded lanes of h are exactly
    #    zero, so plain lane sums divided by the real channel count are correct.
    inv_c = jnp.float32(1.0 / cout)
    mu = jnp.sum(h, axis=-1, keepdims=True) * inv_c
    ms = jnp.sum(h * h, axis=-1, keepdims=True) * inv_c
    var = ms - mu * mu
    hn = (h - mu) * lax.rsqrt(var + EPS)                     # rsqrt -> EUP slot
    a = hn * g_ref[...] + bt_ref[...]

    # -- SiLU + residual add (single lane-dense store)
    o_ref[0] = y1 + a * jax.nn.sigmoid(a)


# --------------------------------- glue ------------------------------------ #

def _im2col_stride2(x_nhwc):
    """3x3 / stride-2 / pad-1 patches: (N, Ho*Wo, 9*C); tap order (kh, kw, c)."""
    N, H, W, C = x_nhwc.shape
    Ho, Wo = (H - 1) // 2 + 1, (W - 1) // 2 + 1
    xp = jnp.pad(x_nhwc, ((0, 0), (1, 1), (1, 1), (0, 0)))
    cols = [xp[:, kh::2, kw::2, :][:, :Ho, :Wo, :]
            for kh in range(3) for kw in range(3)]
    patches = jnp.concatenate(cols, axis=-1)                 # (N, Ho, Wo, 9C)
    return patches.reshape(N, Ho * Wo, 9 * C), Ho, Wo


def down_block_forward(x_nchw, params):
    """DownBlock.forward; input/output in NCHW like PyTorch."""
    N, Cin, H, W = x_nchw.shape
    Cout = params["w_down"].shape[0]

    x = jnp.transpose(x_nchw, (0, 2, 3, 1)).astype(jnp.float32)   # -> NHWC
    p1, Ho, Wo = _im2col_stride2(x)
    rows = Ho * Wo
    K1 = 9 * Cin
    K1p = _round_up(K1, LANE)          # MXU-aligned contraction dim
    Cp = _round_up(Cout, LANE)         # lane-dense channel dim

    # lane-dense / zero-padded packing; bf16 matmul operands
    p1 = jnp.pad(p1, ((0, 0), (0, 0), (0, K1p - K1))).astype(jnp.bfloat16)

    w1 = jnp.transpose(params["w_down"], (2, 3, 1, 0)).reshape(K1, Cout)
    w1 = jnp.pad(w1, ((0, K1p - K1), (0, Cp - Cout))).astype(jnp.bfloat16)

    w2 = jnp.transpose(params["w_res"], (2, 3, 1, 0)).reshape(9, Cout, Cout)
    w2 = jnp.pad(w2, ((0, 0), (0, Cp - Cout), (0, Cp - Cout))).astype(jnp.bfloat16)

    def vec(v):                         # (Cout,) -> (1, Cp) f32, zero padded
        return jnp.pad(v.astype(jnp.float32), (0, Cp - Cout)).reshape(1, Cp)

    b1, b2 = vec(params["b_down"]), vec(params["b_res"])
    g, bt = vec(params["ln_w"]), vec(params["ln_b"])

    kernel = functools.partial(_down_block_kernel, ho=Ho, wo=Wo, cout=Cout)

    out = pl.pallas_call(
        kernel,
        out_shape=jax.ShapeDtypeStruct((N, rows, Cp), jnp.float32),
        grid=(N,),
        in_specs=[
            pl.BlockSpec((1, rows, K1p), lambda n: (n, 0, 0)),   # patches (per image)
            pl.BlockSpec((K1p, Cp), lambda n: (0, 0)),           # w_down (resident)
            pl.BlockSpec((1, Cp), lambda n: (0, 0)),             # b_down
            pl.BlockSpec((9, Cp, Cp), lambda n: (0, 0, 0)),      # w_res taps (resident)
            pl.BlockSpec((1, Cp), lambda n: (0, 0)),             # b_res
            pl.BlockSpec((1, Cp), lambda n: (0, 0)),             # ln gamma
            pl.BlockSpec((1, Cp), lambda n: (0, 0)),             # ln beta
        ],
        out_specs=pl.BlockSpec((1, rows, Cp), lambda n: (n, 0, 0)),
        scratch_shapes=[pltpu.VMEM((Ho + 2, Wo + 2, Cp), jnp.float32)],
        compiler_params=pltpu.CompilerParams(
            dimension_semantics=("parallel",)),
    )(p1, w1, b1, w2, b2, g, bt)

    out = out[:, :, :Cout].reshape(N, Ho, Wo, Cout)
    return jnp.transpose(out, (0, 3, 1, 2))                      # -> NCHW


# --------------------------- pure-JAX reference ----------------------------- #

def ref_forward(x, params):
    dn = ("NCHW", "OIHW", "NCHW")
    y = lax.conv_general_dilated(x, params["w_down"], (2, 2),
                                 ((1, 1), (1, 1)), dimension_numbers=dn)
    y = y + params["b_down"].reshape(1, -1, 1, 1)
    h = lax.conv_general_dilated(y, params["w_res"], (1, 1),
                                 ((1, 1), (1, 1)), dimension_numbers=dn)
    h = h + params["b_res"].reshape(1, -1, 1, 1)
    mu = jnp.mean(h, axis=1, keepdims=True)
    c = h - mu
    v = jnp.mean(c * c, axis=1, keepdims=True)
    hn = c / jnp.sqrt(v + EPS)
    hn = hn * params["ln_w"].reshape(1, -1, 1, 1) \
        + params["ln_b"].reshape(1, -1, 1, 1)
    return y + hn * jax.nn.sigmoid(hn)


# ----------------------------------- main ----------------------------------- #

if __name__ == "__main__":
    key = jax.random.PRNGKey(0)
    k_x, k_wd, k_bd, k_wr, k_br = jax.random.split(key, 5)

    N, Cin, Cout, H, W = 2, 4, 32, 16, 16
    x = jax.random.normal(k_x, (N, Cin, H, W), dtype=jnp.float32)

    params = {
        "w_down": 0.1 * jax.random.normal(k_wd, (Cout, Cin, 3, 3), jnp.float32),
        "b_down": 0.1 * jax.random.normal(k_bd, (Cout,), jnp.float32),
        "w_res":  0.1 * jax.random.normal(k_wr, (Cout, Cout, 3, 3), jnp.float32),
        "b_res":  0.1 * jax.random.normal(k_br, (Cout,), jnp.float32),
        "ln_w":   jnp.ones((Cout,), jnp.float32),   # nn.LayerNorm default init
        "ln_b":   jnp.zeros((Cout,), jnp.float32),
    }

    out = jax.block_until_ready(jax.jit(down_block_forward)(x, params))
    ref = jax.block_until_ready(ref_forward(x, params))

    assert out.shape == (N, Cout, H // 2, W // 2), out.shape
    # bf16 MXU matmuls vs. a pure-f32 XLA reference; LayerNorm over a small
    # channel count amplifies the quantization, hence the loose tolerance.
    max_err = float(jnp.max(jnp.abs(out - ref)))
    assert jnp.allclose(out, ref, atol=7e-2, rtol=7e-2), max_err
    print("KERNEL_OK")
</pallas_src>

<mosaic_0001>
module attributes {stable_mosaic.version = 11 : i64} {
  func.func @_down_block_kernel(%arg0: i32, %arg1: memref<1x64x128xbf16, #tpu.memory_space<vmem>>, %arg2: memref<128x128xbf16, #tpu.memory_space<vmem>>, %arg3: memref<1x128xf32, #tpu.memory_space<vmem>>, %arg4: memref<9x128x128xbf16, #tpu.memory_space<vmem>>, %arg5: memref<1x128xf32, #tpu.memory_space<vmem>>, %arg6: memref<1x128xf32, #tpu.memory_space<vmem>>, %arg7: memref<1x128xf32, #tpu.memory_space<vmem>>, %arg8: memref<1x64x128xf32, #tpu.memory_space<vmem>>, %arg9: memref<10x10x128xf32, #tpu.memory_space<vmem>>) attributes {dimension_semantics = [#tpu.dimension_semantics<parallel>], iteration_bounds = array<i64: 2>, scalar_prefetch = 0 : i64, scratch_operands = 1 : i64, tpu.core_type = #tpu.core_type<tc>, window_params = [{transform_indices = @transform_0, window_bounds = array<i64: 1, 64, 128>}, {pipeline_mode = #tpu.pipeline_mode<synchronous>, transform_indices = @transform_1, window_bounds = array<i64: 128, 128>}, {pipeline_mode = #tpu.pipeline_mode<synchronous>, transform_indices = @transform_2, window_bounds = array<i64: 1, 128>}, {pipeline_mode = #tpu.pipeline_mode<synchronous>, transform_indices = @transform_3, window_bounds = array<i64: 9, 128, 128>}, {pipeline_mode = #tpu.pipeline_mode<synchronous>, transform_indices = @transform_4, window_bounds = array<i64: 1, 128>}, {pipeline_mode = #tpu.pipeline_mode<synchronous>, transform_indices = @transform_5, window_bounds = array<i64: 1, 128>}, {pipeline_mode = #tpu.pipeline_mode<synchronous>, transform_indices = @transform_6, window_bounds = array<i64: 1, 128>}, {transform_indices = @transform_7, window_bounds = array<i64: 1, 64, 128>}]} {
    %c0 = arith.constant 0 : index
    %c0_0 = arith.constant 0 : index
    %c0_1 = arith.constant 0 : index
    %0 = vector.load %arg1[%c0, %c0_0, %c0_1] : memref<1x64x128xbf16, #tpu.memory_space<vmem>>, vector<1x64x128xbf16>
    %1 = vector.shape_cast %0 : vector<1x64x128xbf16> to vector<64x128xbf16>
    %c0_2 = arith.constant 0 : index
    %c0_3 = arith.constant 0 : index
    %2 = vector.load %arg2[%c0_2, %c0_3] : memref<128x128xbf16, #tpu.memory_space<vmem>>, vector<128x128xbf16>
    %cst = arith.constant dense<0.000000e+00> : vector<64x128xf32>
    %3 = tpu.matmul %1, %2, %cst {dimension_numbers = #tpu.dot_dimension_numbers<[1], [0], [0], [1], [0, 0, 1, 1], [], []>} : vector<64x128xbf16>, vector<128x128xbf16>, vector<64x128xf32> -> vector<64x128xf32>
    %c0_4 = arith.constant 0 : index
    %c0_5 = arith.constant 0 : index
    %4 = vector.load %arg3[%c0_4, %c0_5] : memref<1x128xf32, #tpu.memory_space<vmem>>, vector<1x128xf32>
    %5 = vector.broadcast %4 : vector<1x128xf32> to vector<64x128xf32>
    %6 = arith.addf %3, %5 : vector<64x128xf32>
    %cst_6 = arith.constant 0.000000e+00 : f32
    %7 = vector.broadcast %cst_6 : f32 to vector<10x10x128xf32>
    %c0_7 = arith.constant 0 : index
    %c0_8 = arith.constant 0 : index
    %c0_9 = arith.constant 0 : index
    %8 = vector.load %arg9[%c0_7, %c0_8, %c0_9] : memref<10x10x128xf32, #tpu.memory_space<vmem>>, vector<10x10x128xf32>
    tpu.vector_store %arg9[%c0_7, %c0_8, %c0_9], %7 {strides = array<i32>} : memref<10x10x128xf32, #tpu.memory_space<vmem>>, vector<10x10x128xf32>,
    %9 = vector.shape_cast %6 : vector<64x128xf32> to vector<8x8x128xf32>
    %c1 = arith.constant 1 : index
    %c1_10 = arith.constant 1 : index
    %c0_11 = arith.constant 0 : index
    %10 = vector.load %arg9[%c1, %c1_10, %c0_11] : memref<10x10x128xf32, #tpu.memory_space<vmem>>, vector<8x8x128xf32>
    tpu.vector_store %arg9[%c1, %c1_10, %c0_11], %9 {strides = array<i32>} : memref<10x10x128xf32, #tpu.memory_space<vmem>>, vector<8x8x128xf32>,
    %cst_12 = arith.constant 0.000000e+00 : f32
    %11 = vector.broadcast %cst_12 : f32 to vector<64x128xf32>
    %c0_13 = arith.constant 0 : index
    %c0_14 = arith.constant 0 : index
    %c0_15 = arith.constant 0 : index
    %12 = vector.load %arg9[%c0_13, %c0_14, %c0_15] : memref<10x10x128xf32, #tpu.memory_space<vmem>>, vector<8x8x128xf32>
    %13 = vector.shape_cast %12 : vector<8x8x128xf32> to vector<64x128xf32>
    %14 = arith.truncf %13 : vector<64x128xf32> to vector<64x128xbf16>
    %c0_16 = arith.constant 0 : index
    %c0_17 = arith.constant 0 : index
    %c0_18 = arith.constant 0 : index
    %15 = vector.load %arg4[%c0_16, %c0_17, %c0_18] : memref<9x128x128xbf16, #tpu.memory_space<vmem>>, vector<1x128x128xbf16>
    %16 = vector.shape_cast %15 : vector<1x128x128xbf16> to vector<128x128xbf16>
    %cst_19 = arith.constant dense<0.000000e+00> : vector<64x128xf32>
    %17 = tpu.matmul %14, %16, %cst_19 {dimension_numbers = #tpu.dot_dimension_numbers<[1], [0], [0], [1], [0, 0, 1, 1], [], []>} : vector<64x128xbf16>, vector<128x128xbf16>, vector<64x128xf32> -> vector<64x128xf32>
    %18 = arith.addf %11, %17 : vector<64x128xf32>
    %c0_20 = arith.constant 0 : index
    %c1_21 = arith.constant 1 : index
    %c0_22 = arith.constant 0 : index
    %19 = vector.load %arg9[%c0_20, %c1_21, %c0_22] : memref<10x10x128xf32, #tpu.memory_space<vmem>>, vector<8x8x128xf32>
    %20 = vector.shape_cast %19 : vector<8x8x128xf32> to vector<64x128xf32>
    %21 = arith.truncf %20 : vector<64x128xf32> to vector<64x128xbf16>
    %c1_23 = arith.constant 1 : index
    %c0_24 = arith.constant 0 : index
    %c0_25 = arith.constant 0 : index
    %22 = vector.load %arg4[%c1_23, %c0_24, %c0_25] : memref<9x128x128xbf16, #tpu.memory_space<vmem>>, vector<1x128x128xbf16>
    %23 = vector.shape_cast %22 : vector<1x128x128xbf16> to vector<128x128xbf16>
    %cst_26 = arith.constant dense<0.000000e+00> : vector<64x128xf32>
    %24 = tpu.matmul %21, %23, %cst_26 {dimension_numbers = #tpu.dot_dimension_numbers<[1], [0], [0], [1], [0, 0, 1, 1], [], []>} : vector<64x128xbf16>, vector<128x128xbf16>, vector<64x128xf32> -> vector<64x128xf32>
    %25 = arith.addf %18, %24 : vector<64x128xf32>
    %c0_27 = arith.constant 0 : index
    %c2 = arith.constant 2 : index
    %c0_28 = arith.constant 0 : index
    %26 = vector.load %arg9[%c0_27, %c2, %c0_28] : memref<10x10x128xf32, #tpu.memory_space<vmem>>, vector<8x8x128xf32>
    %27 = vector.shape_cast %26 : vector<8x8x128xf32> to vector<64x128xf32>
    %28 = arith.truncf %27 : vector<64x128xf32> to vector<64x128xbf16>
    %c2_29 = arith.constant 2 : index
    %c0_30 = arith.constant 0 : index
    %c0_31 = arith.constant 0 : index
    %29 = vector.load %arg4[%c2_29, %c0_30, %c0_31] : memref<9x128x128xbf16, #tpu.memory_space<vmem>>, vector<1x128x128xbf16>
    %30 = vector.shape_cast %29 : vector<1x128x128xbf16> to vector<128x128xbf16>
    %cst_32 = arith.constant dense<0.000000e+00> : vector<64x128xf32>
    %31 = tpu.matmul %28, %30, %cst_32 {dimension_numbers = #tpu.dot_dimension_numbers<[1], [0], [0], [1], [0, 0, 1, 1], [], []>} : vector<64x128xbf16>, vector<128x128xbf16>, vector<64x128xf32> -> vector<64x128xf32>
    %32 = arith.addf %25, %31 : vector<64x128xf32>
    %c1_33 = arith.constant 1 : index
    %c0_34 = arith.constant 0 : index
    %c0_35 = arith.constant 0 : index
    %33 = vector.load %arg9[%c1_33, %c0_34, %c0_35] : memref<10x10x128xf32, #tpu.memory_space<vmem>>, vector<8x8x128xf32>
    %34 = vector.shape_cast %33 : vector<8x8x128xf32> to vector<64x128xf32>
    %35 = arith.truncf %34 : vector<64x128xf32> to vector<64x128xbf16>
    %c3 = arith.constant 3 : index
    %c0_36 = arith.constant 0 : index
    %c0_37 = arith.constant 0 : index
    %36 = vector.load %arg4[%c3, %c0_36, %c0_37] : memref<9x128x128xbf16, #tpu.memory_space<vmem>>, vector<1x128x128xbf16>
    %37 = vector.shape_cast %36 : vector<1x128x128xbf16> to vector<128x128xbf16>
    %cst_38 = arith.constant dense<0.000000e+00> : vector<64x128xf32>
    %38 = tpu.matmul %35, %37, %cst_38 {dimension_numbers = #tpu.dot_dimension_numbers<[1], [0], [0], [1], [0, 0, 1, 1], [], []>} : vector<64x128xbf16>, vector<128x128xbf16>, vector<64x128xf32> -> vector<64x128xf32>
    %39 = arith.addf %32, %38 : vector<64x128xf32>
    %c1_39 = arith.constant 1 : index
    %c1_40 = arith.constant 1 : index
    %c0_41 = arith.constant 0 : index
    %40 = vector.load %arg9[%c1_39, %c1_40, %c0_41] : memref<10x10x128xf32, #tpu.memory_space<vmem>>, vector<8x8x128xf32>
    %41 = vector.shape_cast %40 : vector<8x8x128xf32> to vector<64x128xf32>
    %42 = arith.truncf %41 : vector<64x128xf32> to vector<64x128xbf16>
    %c4 = arith.constant 4 : index
    %c0_42 = arith.constant 0 : index
    %c0_43 = arith.constant 0 : index
    %43 = vector.load %arg4[%c4, %c0_42, %c0_43] : memref<9x128x128xbf16, #tpu.memory_space<vmem>>, vector<1x128x128xbf16>
    %44 = vector.shape_cast %43 : vector<1x128x128xbf16> to vector<128x128xbf16>
    %cst_44 = arith.constant dense<0.000000e+00> : vector<64x128xf32>
    %45 = tpu.matmul %42, %44, %cst_44 {dimension_numbers = #tpu.dot_dimension_numbers<[1], [0], [0], [1], [0, 0, 1, 1], [], []>} : vector<64x128xbf16>, vector<128x128xbf16>, vector<64x128xf32> -> vector<64x128xf32>
    %46 = arith.addf %39, %45 : vector<64x128xf32>
    %c1_45 = arith.constant 1 : index
    %c2_46 = arith.constant 2 : index
    %c0_47 = arith.constant 0 : index
    %47 = vector.load %arg9[%c1_45, %c2_46, %c0_47] : memref<10x10x128xf32, #tpu.memory_space<vmem>>, vector<8x8x128xf32>
    %48 = vector.shape_cast %47 : vector<8x8x128xf32> to vector<64x128xf32>
    %49 = arith.truncf %48 : vector<64x128xf32> to vector<64x128xbf16>
    %c5 = arith.constant 5 : index
    %c0_48 = arith.constant 0 : index
    %c0_49 = arith.constant 0 : index
    %50 = vector.load %arg4[%c5, %c0_48, %c0_49] : memref<9x128x128xbf16, #tpu.memory_space<vmem>>, vector<1x128x128xbf16>
    %51 = vector.shape_cast %50 : vector<1x128x128xbf16> to vector<128x128xbf16>
    %cst_50 = arith.constant dense<0.000000e+00> : vector<64x128xf32>
    %52 = tpu.matmul %49, %51, %cst_50 {dimension_numbers = #tpu.dot_dimension_numbers<[1], [0], [0], [1], [0, 0, 1, 1], [], []>} : vector<64x128xbf16>, vector<128x128xbf16>, vector<64x128xf32> -> vector<64x128xf32>
    %53 = arith.addf %46, %52 : vector<64x128xf32>
    %c2_51 = arith.constant 2 : index
    %c0_52 = arith.constant 0 : index
    %c0_53 = arith.constant 0 : index
    %54 = vector.load %arg9[%c2_51, %c0_52, %c0_53] : memref<10x10x128xf32, #tpu.memory_space<vmem>>, vector<8x8x128xf32>
    %55 = vector.shape_cast %54 : vector<8x8x128xf32> to vector<64x128xf32>
    %56 = arith.truncf %55 : vector<64x128xf32> to vector<64x128xbf16>
    %c6 = arith.constant 6 : index
    %c0_54 = arith.constant 0 : index
    %c0_55 = arith.constant 0 : index
    %57 = vector.load %arg4[%c6, %c0_54, %c0_55] : memref<9x128x128xbf16, #tpu.memory_space<vmem>>, vector<1x128x128xbf16>
    %58 = vector.shape_cast %57 : vector<1x128x128xbf16> to vector<128x128xbf16>
    %cst_56 = arith.constant dense<0.000000e+00> : vector<64x128xf32>
    %59 = tpu.matmul %56, %58, %cst_56 {dimension_numbers = #tpu.dot_dimension_numbers<[1], [0], [0], [1], [0, 0, 1, 1], [], []>} : vector<64x128xbf16>, vector<128x128xbf16>, vector<64x128xf32> -> vector<64x128xf32>
    %60 = arith.addf %53, %59 : vector<64x128xf32>
    %c2_57 = arith.constant 2 : index
    %c1_58 = arith.constant 1 : index
    %c0_59 = arith.constant 0 : index
    %61 = vector.load %arg9[%c2_57, %c1_58, %c0_59] : memref<10x10x128xf32, #tpu.memory_space<vmem>>, vector<8x8x128xf32>
    %62 = vector.shape_cast %61 : vector<8x8x128xf32> to vector<64x128xf32>
    %63 = arith.truncf %62 : vector<64x128xf32> to vector<64x128xbf16>
    %c7 = arith.constant 7 : index
    %c0_60 = arith.constant 0 : index
    %c0_61 = arith.constant 0 : index
    %64 = vector.load %arg4[%c7, %c0_60, %c0_61] : memref<9x128x128xbf16, #tpu.memory_space<vmem>>, vector<1x128x128xbf16>
    %65 = vector.shape_cast %64 : vector<1x128x128xbf16> to vector<128x128xbf16>
    %cst_62 = arith.constant dense<0.000000e+00> : vector<64x128xf32>
    %66 = tpu.matmul %63, %65, %cst_62 {dimension_numbers = #tpu.dot_dimension_numbers<[1], [0], [0], [1], [0, 0, 1, 1], [], []>} : vector<64x128xbf16>, vector<128x128xbf16>, vector<64x128xf32> -> vector<64x128xf32>
    %67 = arith.addf %60, %66 : vector<64x128xf32>
    %c2_63 = arith.constant 2 : index
    %c2_64 = arith.constant 2 : index
    %c0_65 = arith.constant 0 : index
    %68 = vector.load %arg9[%c2_63, %c2_64, %c0_65] : memref<10x10x128xf32, #tpu.memory_space<vmem>>, vector<8x8x128xf32>
    %69 = vector.shape_cast %68 : vector<8x8x128xf32> to vector<64x128xf32>
    %70 = arith.truncf %69 : vector<64x128xf32> to vector<64x128xbf16>
    %c8 = arith.constant 8 : index
    %c0_66 = arith.constant 0 : index
    %c0_67 = arith.constant 0 : index
    %71 = vector.load %arg4[%c8, %c0_66, %c0_67] : memref<9x128x128xbf16, #tpu.memory_space<vmem>>, vector<1x128x128xbf16>
    %72 = vector.shape_cast %71 : vector<1x128x128xbf16> to vector<128x128xbf16>
    %cst_68 = arith.constant dense<0.000000e+00> : vector<64x128xf32>
    %73 = tpu.matmul %70, %72, %cst_68 {dimension_numbers = #tpu.dot_dimension_numbers<[1], [0], [0], [1], [0, 0, 1, 1], [], []>} : vector<64x128xbf16>, vector<128x128xbf16>, vector<64x128xf32> -> vector<64x128xf32>
    %74 = arith.addf %67, %73 : vector<64x128xf32>
    %c0_69 = arith.constant 0 : index
    %c0_70 = arith.constant 0 : index
    %75 = vector.load %arg5[%c0_69, %c0_70] : memref<1x128xf32, #tpu.memory_space<vmem>>, vector<1x128xf32>
    %76 = vector.broadcast %75 : vector<1x128xf32> to vector<64x128xf32>
    %77 = arith.addf %74, %76 : vector<64x128xf32>
    %cst_71 = arith.constant dense<0.000000e+00> : vector<64xf32>
    %78 = vector.multi_reduction <add>, %77, %cst_71 [1] : vector<64x128xf32> to vector<64xf32>
    %79 = vector.shape_cast %78 : vector<64xf32> to vector<64x1xf32>
    %cst_72 = arith.constant 3.125000e-02 : f32
    %80 = vector.broadcast %cst_72 : f32 to vector<64x1xf32>
    %81 = arith.mulf %79, %80 : vector<64x1xf32>
    %82 = arith.mulf %77, %77 : vector<64x128xf32>
    %cst_73 = arith.constant dense<0.000000e+00> : vector<64xf32>
    %83 = vector.multi_reduction <add>, %82, %cst_73 [1] : vector<64x128xf32> to vector<64xf32>
    %84 = vector.shape_cast %83 : vector<64xf32> to vector<64x1xf32>
    %cst_74 = arith.constant 3.125000e-02 : f32
    %85 = vector.broadcast %cst_74 : f32 to vector<64x1xf32>
    %86 = arith.mulf %84, %85 : vector<64x1xf32>
    %87 = arith.mulf %81, %81 : vector<64x1xf32>
    %88 = arith.subf %86, %87 : vector<64x1xf32>
    %89 = vector.broadcast %81 : vector<64x1xf32> to vector<64x128xf32>
    %90 = arith.subf %77, %89 : vector<64x128xf32>
    %cst_75 = arith.constant 9.99999974E-6 : f32
    %91 = vector.broadcast %cst_75 : f32 to vector<64x1xf32>
    %92 = arith.addf %88, %91 : vector<64x1xf32>
    %93 = math.rsqrt %92 : vector<64x1xf32>
    %94 = vector.broadcast %93 : vector<64x1xf32> to vector<64x128xf32>
    %95 = arith.mulf %90, %94 : vector<64x128xf32>
    %c0_76 = arith.constant 0 : index
    %c0_77 = arith.constant 0 : index
    %96 = vector.load %arg6[%c0_76, %c0_77] : memref<1x128xf32, #tpu.memory_space<vmem>>, vector<1x128xf32>
    %97 = vector.broadcast %96 : vector<1x128xf32> to vector<64x128xf32>
    %98 = arith.mulf %95, %97 : vector<64x128xf32>
    %c0_78 = arith.constant 0 : index
    %c0_79 = arith.constant 0 : index
    %99 = vector.load %arg7[%c0_78, %c0_79] : memref<1x128xf32, #tpu.memory_space<vmem>>, vector<1x128xf32>
    %100 = vector.broadcast %99 : vector<1x128xf32> to vector<64x128xf32>
    %101 = arith.addf %98, %100 : vector<64x128xf32>
    %102 = arith.negf %101 : vector<64x128xf32>
    %103 = math.exp %102 : vector<64x128xf32>
    %cst_80 = arith.constant 1.000000e+00 : f32
    %104 = vector.broadcast %cst_80 : f32 to vector<64x128xf32>
    %105 = arith.addf %104, %103 : vector<64x128xf32>
    %106 = arith.divf %104, %105 : vector<64x128xf32>
    %107 = arith.mulf %101, %106 : vector<64x128xf32>
    %108 = arith.addf %6, %107 : vector<64x128xf32>
    %c0_81 = arith.constant 0 : index
    %c0_82 = arith.constant 0 : index
    %c0_83 = arith.constant 0 : index
    %109 = vector.load %arg8[%c0_81, %c0_82, %c0_83] : memref<1x64x128xf32, #tpu.memory_space<vmem>>, vector<1x64x128xf32>
    %110 = vector.shape_cast %109 : vector<1x64x128xf32> to vector<64x128xf32>
    %111 = vector.shape_cast %108 : vector<64x128xf32> to vector<1x64x128xf32>
    tpu.vector_store %arg8[%c0_81, %c0_82, %c0_83], %111 {strides = array<i32>} : memref<1x64x128xf32, #tpu.memory_space<vmem>>, vector<1x64x128xf32>,
    return
  }
  func.func @transform_0(%arg0: i32) -> (i32, i32, i32) {
    %c0_i32 = arith.constant 0 : i32
    %c0_i32_0 = arith.constant 0 : i32
    %c0_i32_1 = arith.constant 0 : i32
    return %arg0, %c0_i32, %c0_i32_0 : i32, i32, i32
  }
  func.func @transform_1(%arg0: i32) -> (i32, i32) {
    %c0_i32 = arith.constant 0 : i32
    %c0_i32_0 = arith.constant 0 : i32
    %c0_i32_1 = arith.constant 0 : i32
    return %c0_i32, %c0_i32_0 : i32, i32
  }
  func.func @transform_2(%arg0: i32) -> (i32, i32) {
    %c0_i32 = arith.constant 0 : i32
    %c0_i32_0 = arith.constant 0 : i32
    %c0_i32_1 = arith.constant 0 : i32
    return %c0_i32, %c0_i32_0 : i32, i32
  }
  func.func @transform_3(%arg0: i32) -> (i32, i32, i32) {
    %c0_i32 = arith.constant 0 : i32
    %c0_i32_0 = arith.constant 0 : i32
    %c0_i32_1 = arith.constant 0 : i32
    %c0_i32_2 = arith.constant 0 : i32
    return %c0_i32, %c0_i32_0, %c0_i32_1 : i32, i32, i32
  }
  func.func @transform_4(%arg0: i32) -> (i32, i32) {
    %c0_i32 = arith.constant 0 : i32
    %c0_i32_0 = arith.constant 0 : i32
    %c0_i32_1 = arith.constant 0 : i32
    return %c0_i32, %c0_i32_0 : i32, i32
  }
  func.func @transform_5(%arg0: i32) -> (i32, i32) {
    %c0_i32 = arith.constant 0 : i32
    %c0_i32_0 = arith.constant 0 : i32
    %c0_i32_1 = arith.constant 0 : i32
    return %c0_i32, %c0_i32_0 : i32, i32
  }
  func.func @transform_6(%arg0: i32) -> (i32, i32) {
    %c0_i32 = arith.constant 0 : i32
    %c0_i32_0 = arith.constant 0 : i32
    %c0_i32_1 = arith.constant 0 : i32
    return %c0_i32, %c0_i32_0 : i32, i32
  }
  func.func @transform_7(%arg0: i32) -> (i32, i32, i32) {
    %c0_i32 = arith.constant 0 : i32
    %c0_i32_0 = arith.constant 0 : i32
    %c0_i32_1 = arith.constant 0 : i32
    return %arg0, %c0_i32, %c0_i32_0 : i32, i32, i32
  }
}

</mosaic_0001>

<llo_original>
// kernel: down_block_forward.1
$region0: #{down_block_forward.1}
  #allocation0 [shape = 'u32[]', space=smem, size = 0x4, offset = 0x4, fixed_abs, tag = 'smem constant byte address 0x4 - core index']
  #allocation1 [shape = 'u32[144,128]{1,0:T(1,128)}', space=vmem, size = 0x12000, scoped, tag = 'internal scratch']
  #allocation2 [shape = 'f32[10,10,128]{2,1,0:T(8,128)}', space=vmem, size = 0x14000, scoped, tag = 'scratch operand']
  %s0 = inlined_call_operand.vmem [shape: bf16[2,64,128], index: 0, kind: input, shape index: {}]
  %s1 = inlined_call_operand.vmem [shape: bf16[128,128], index: 1, kind: input, shape index: {}]
  %s2 = inlined_call_operand.vmem [shape: f32[1,128], index: 2, kind: input, shape index: {}]
  %s3 = inlined_call_operand.vmem [shape: bf16[9,128,128], index: 3, kind: input, shape index: {}]
  %s4 = inlined_call_operand.vmem [shape: f32[1,128], index: 4, kind: input, shape index: {}]
  %s5 = inlined_call_operand.vmem [shape: f32[1,128], index: 5, kind: input, shape index: {}]
  %s6 = inlined_call_operand.vmem [shape: f32[1,128], index: 6, kind: input, shape index: {}]
  %s7 = inlined_call_operand.vmem [shape: f32[2,64,128], index: 7, kind: output, shape index: {}]
  %s8 = sld [smem:[#allocation0]]
  $region61: #{down_block_forward.1} parent=0
    _
  %s10 = ssub.s32 1, %s8
  %s11 = scalar_select 0, %s10, %s8
  loop: start=0, step=1, limit=4
  $region2: #{down_block_forward.1} parent=0 // loop_pre_header
    _
  $region3: #{down_block_forward.1} parent=0 // loop_header
    %s13 = sphi 0, %s17
    %p14 = scmp.ge.s32.totalorder %s13, 4
    %s23 = sphi 0, %s25
    %s26 = sphi 0, %s23
    %s27 = sphi 0, %s26
    %s43 = sphi 0, %s27
    %s47 = sphi 0, %s47
    %s49 = sphi 0, %s47
    %s50 = sphi 0, %s49
    %s64 = sphi 0, %s50
    %s68 = sphi 0, %s68
    %s70 = sphi 0, %s68
    %s71 = sphi 0, %s70
    %s85 = sphi 0, %s71
    %s89 = sphi 0, %s89
    %s91 = sphi 0, %s89
    %s92 = sphi 0, %s91
    %s106 = sphi 0, %s92
    %s110 = sphi 0, %s110
    %s112 = sphi 0, %s110
    %s113 = sphi 0, %s112
    %s127 = sphi 0, %s113
    %s131 = sphi 0, %s131
    %s133 = sphi 0, %s131
    %s134 = sphi 0, %s133
    %s148 = sphi 0, %s134
    %s152 = sphi 0, %s152
    %s154 = sphi 0, %s152
    %s155 = sphi 0, %s154
    %s169 = sphi 0, %s155
    %s175 = sphi 0, %s177
    %s178 = sphi 0, %s175
    %s179 = sphi 0, %s178
    %s195 = sphi 0, %s179
  $region4: #{down_block_forward.1} parent=0 // loop_header_branch
    %16 = sbr.rel (%p14) target = $region8
  $region5: #{down_block_forward.1} parent=0 // loop_body
    %s18 = ssub.s32 %s13, 1
    %s19 = ssub.s32 %s13, 2
    %s20 = sadd.s32 %s13, 1
    %s21 = ssub.s32 %s13, %s20
    %p22 = scmp.eq.s32.totalorder %s21, 0
    %s24 = sadd.s32 %s23, 1
    %s25 = scalar_select %p22, %s23, %s24
    %p28 = pneg %p22
    %p29 = scmp.eq.s32.totalorder %s13, 1
    %p30 = por %p28, %p29
    %p31 = scmp.ne.s32.totalorder %s23, %s26
    %p32 = scmp.eq.s32.totalorder %s13, 0
    %p33 = por %p31, %p32
    %p34 = scmp.ne.s32.totalorder %s23, %s26
    %p35 = scmp.eq.s32.totalorder %s18, 1
    %p36 = por %p34, %p35
    %p37 = scmp.ne.s32.totalorder %s26, %s27
    %p38 = scmp.eq.s32.totalorder %s18, 0
    %p39 = por %p37, %p38
    %p40 = scmp.ne.s32.totalorder %s26, %s27
    %p41 = scmp.eq.s32.totalorder %s19, 1
    %p42 = por %p40, %p41
    %p44 = scmp.ne.s32.totalorder %s27, %s43
    %p45 = scmp.eq.s32.totalorder %s19, 0
    %p46 = por %p44, %p45
    %s48 = sadd.s32 %s47, 1
    %p51 = scmp.eq.s32.totalorder %s13, 1
    %p52 = scmp.ne.s32.totalorder %s47, %s49
    %p53 = scmp.eq.s32.totalorder %s13, 0
    %p54 = por %p52, %p53
    %p55 = scmp.ne.s32.totalorder %s47, %s49
    %p56 = scmp.eq.s32.totalorder %s18, 1
    %p57 = por %p55, %p56
    %p58 = scmp.ne.s32.totalorder %s49, %s50
    %p59 = scmp.eq.s32.totalorder %s18, 0
    %p60 = por %p58, %p59
    %p61 = scmp.ne.s32.totalorder %s49, %s50
    %p62 = scmp.eq.s32.totalorder %s19, 1
    %p63 = por %p61, %p62
    %p65 = scmp.ne.s32.totalorder %s50, %s64
    %p66 = scmp.eq.s32.totalorder %s19, 0
    %p67 = por %p65, %p66
    %s69 = sadd.s32 %s68, 1
    %p72 = scmp.eq.s32.totalorder %s13, 1
    %p73 = scmp.ne.s32.totalorder %s68, %s70
    %p74 = scmp.eq.s32.totalorder %s13, 0
    %p75 = por %p73, %p74
    %p76 = scmp.ne.s32.totalorder %s68, %s70
    %p77 = scmp.eq.s32.totalorder %s18, 1
    %p78 = por %p76, %p77
    %p79 = scmp.ne.s32.totalorder %s70, %s71
    %p80 = scmp.eq.s32.totalorder %s18, 0
    %p81 = por %p79, %p80
    %p82 = scmp.ne.s32.totalorder %s70, %s71
    %p83 = scmp.eq.s32.totalorder %s19, 1
    %p84 = por %p82, %p83
    %p86 = scmp.ne.s32.totalorder %s71, %s85
    %p87 = scmp.eq.s32.totalorder %s19, 0
    %p88 = por %p86, %p87
    %s90 = sadd.s32 %s89, 1
    %p93 = scmp.eq.s32.totalorder %s13, 1
    %p94 = scmp.ne.s32.totalorder %s89, %s91
    %p95 = scmp.eq.s32.totalorder %s13, 0
    %p96 = por %p94, %p95
    %p97 = scmp.ne.s32.totalorder %s89, %s91
    %p98 = scmp.eq.s32.totalorder %s18, 1
    %p99 = por %p97, %p98
    %p100 = scmp.ne.s32.totalorder %s91, %s92
    %p101 = scmp.eq.s32.totalorder %s18, 0
    %p102 = por %p100, %p101
    %p103 = scmp.ne.s32.totalorder %s91, %s92
    %p104 = scmp.eq.s32.totalorder %s19, 1
    %p105 = por %p103, %p104
    %p107 = scmp.ne.s32.totalorder %s92, %s106
    %p108 = scmp.eq.s32.totalorder %s19, 0
    %p109 = por %p107, %p108
    %s111 = sadd.s32 %s110, 1
    %p114 = scmp.eq.s32.totalorder %s13, 1
    %p115 = scmp.ne.s32.totalorder %s110, %s112
    %p116 = scmp.eq.s32.totalorder %s13, 0
    %p117 = por %p115, %p116
    %p118 = scmp.ne.s32.totalorder %s110, %s112
    %p119 = scmp.eq.s32.totalorder %s18, 1
    %p120 = por %p118, %p119
    %p121 = scmp.ne.s32.totalorder %s112, %s113
    %p122 = scmp.eq.s32.totalorder %s18, 0
    %p123 = por %p121, %p122
    %p124 = scmp.ne.s32.totalorder %s112, %s113
    %p125 = scmp.eq.s32.totalorder %s19, 1
    %p126 = por %p124, %p125
    %p128 = scmp.ne.s32.totalorder %s113, %s127
    %p129 = scmp.eq.s32.totalorder %s19, 0
    %p130 = por %p128, %p129
    %s132 = sadd.s32 %s131, 1
    %p135 = scmp.eq.s32.totalorder %s13, 1
    %p136 = scmp.ne.s32.totalorder %s131, %s133
    %p137 = scmp.eq.s32.totalorder %s13, 0
    %p138 = por %p136, %p137
    %p139 = scmp.ne.s32.totalorder %s131, %s133
    %p140 = scmp.eq.s32.totalorder %s18, 1
    %p141 = por %p139, %p140
    %p142 = scmp.ne.s32.totalorder %s133, %s134
    %p143 = scmp.eq.s32.totalorder %s18, 0
    %p144 = por %p142, %p143
    %p145 = scmp.ne.s32.totalorder %s133, %s134
    %p146 = scmp.eq.s32.totalorder %s19, 1
    %p147 = por %p145, %p146
    %p149 = scmp.ne.s32.totalorder %s134, %s148
    %p150 = scmp.eq.s32.totalorder %s19, 0
    %p151 = por %p149, %p150
    %s153 = sadd.s32 %s152, 1
    %p156 = scmp.eq.s32.totalorder %s13, 1
    %p157 = scmp.ne.s32.totalorder %s152, %s154
    %p158 = scmp.eq.s32.totalorder %s13, 0
    %p159 = por %p157, %p158
    %p160 = scmp.ne.s32.totalorder %s152, %s154
    %p161 = scmp.eq.s32.totalorder %s18, 1
    %p162 = por %p160, %p161
    %p163 = scmp.ne.s32.totalorder %s154, %s155
    %p164 = scmp.eq.s32.totalorder %s18, 0
    %p165 = por %p163, %p164
    %p166 = scmp.ne.s32.totalorder %s154, %s155
    %p167 = scmp.eq.s32.totalorder %s19, 1
    %p168 = por %p166, %p167
    %p170 = scmp.ne.s32.totalorder %s155, %s169
    %p171 = scmp.eq.s32.totalorder %s19, 0
    %p172 = por %p170, %p171
    %s173 = ssub.s32 %s13, %s20
    %p174 = scmp.eq.s32.totalorder %s173, 0
    %s176 = sadd.s32 %s175, 1
    %s177 = scalar_select %p174, %s175, %s176
    %p180 = pneg %p174
    %p181 = scmp.eq.s32.totalorder %s13, 1
    %p182 = por %p180, %p181
    %p183 = scmp.ne.s32.totalorder %s175, %s178
    %p184 = scmp.eq.s32.totalorder %s13, 0
    %p185 = por %p183, %p184
    %p186 = scmp.ne.s32.totalorder %s175, %s178
    %p187 = scmp.eq.s32.totalorder %s18, 1
    %p188 = por %p186, %p187
    %p189 = scmp.ne.s32.totalorder %s178, %s179
    %p190 = scmp.eq.s32.totalorder %s18, 0
    %p191 = por %p189, %p190
    %p192 = scmp.ne.s32.totalorder %s178, %s179
    %p193 = scmp.eq.s32.totalorder %s19, 1
    %p194 = por %p192, %p193
    %p196 = scmp.ne.s32.totalorder %s179, %s195
    %p197 = scmp.eq.s32.totalorder %s19, 0
    %p198 = por %p196, %p197
    %p199 = scmp.le.s32.totalorder 1, %s13
    %p200 = scmp.lt.s32.totalorder %s13, 3
    %p201 = pnand %p199, %p200
    %p202 = pneg %p201
    // Predicated region
    $region9: #{down_block_forward.1} parent=5 // pred_check
      _
    $region10: #{down_block_forward.1} parent=5 // pred_check_branch
      %204 = sbr.rel (%p201) target = $region12
    $region11: #{down_block_forward.1} parent=5 // pred_region
      %s205 = ssub.s32 %s13, 1
      // Predicated region
      $region13: #{down_block_forward.1} parent=11 // pred_check
        %p206 = pneg %p60
      $region14: #{down_block_forward.1} parent=11 // pred_check_branch
        %208 = sbr.rel (%p206) target = $region16
      $region15: #{down_block_forward.1} parent=11 // pred_region
        _
      $region16: #{down_block_forward.1} parent=11 // pred_fallthru
        _
      // Predicated region
      $region17: #{down_block_forward.1} parent=11 // pred_check
        %p209 = pneg %p81
      $region18: #{down_block_forward.1} parent=11 // pred_check_branch
        %211 = sbr.rel (%p209) target = $region20
      $region19: #{down_block_forward.1} parent=11 // pred_region
        _
      $region20: #{down_block_forward.1} parent=11 // pred_fallthru
        _
      // Predicated region
      $region21: #{down_block_forward.1} parent=11 // pred_check
        %p212 = pneg %p102
      $region22: #{down_block_forward.1} parent=11 // pred_check_branch
        %214 = sbr.rel (%p212) target = $region24
      $region23: #{down_block_forward.1} parent=11 // pred_region
        _
      $region24: #{down_block_forward.1} parent=11 // pred_fallthru
        _
      // Predicated region
      $region25: #{down_block_forward.1} parent=11 // pred_check
        %p215 = pneg %p123
      $region26: #{down_block_forward.1} parent=11 // pred_check_branch
        %217 = sbr.rel (%p215) target = $region28
      $region27: #{down_block_forward.1} parent=11 // pred_region
        _
      $region28: #{down_block_forward.1} parent=11 // pred_fallthru
        _
      // Predicated region
      $region29: #{down_block_forward.1} parent=11 // pred_check
        %p218 = pneg %p144
      $region30: #{down_block_forward.1} parent=11 // pred_check_branch
        %220 = sbr.rel (%p218) target = $region32
      $region31: #{down_block_forward.1} parent=11 // pred_region
        _
      $region32: #{down_block_forward.1} parent=11 // pred_fallthru
        _
      // Predicated region
      $region33: #{down_block_forward.1} parent=11 // pred_check
        %p221 = pneg %p165
      $region34: #{down_block_forward.1} parent=11 // pred_check_branch
        %223 = sbr.rel (%p221) target = $region36
      $region35: #{down_block_forward.1} parent=11 // pred_region
        _
      $region36: #{down_block_forward.1} parent=11 // pred_fallthru
        _
    $region12: #{down_block_forward.1} parent=5 // pred_fallthru
      _
    %p224 = scmp.lt.s32.totalorder %s13, 2
    // Predicated region
    $region37: #{down_block_forward.1} parent=5 // pred_check
      %p225 = pneg %p224
    $region38: #{down_block_forward.1} parent=5 // pred_check_branch
      %227 = sbr.rel (%p225) target = $region40
    $region39: #{down_block_forward.1} parent=5 // pred_region
      // Predicated region
      $region41: #{down_block_forward.1} parent=39 // pred_check
        %p228 = pneg %p33
      $region42: #{down_block_forward.1} parent=39 // pred_check_branch
        %230 = sbr.rel (%p228) target = $region44
      $region43: #{down_block_forward.1} parent=39 // pred_region
        %p231 = scmp.lt.s32.totalorder %s13, 1
        %s232 = scalar_select %p231, %s13, 1
        %s233 = smul.addr %s232, 8
        %s234 = smul.addr %s233, 4
        %s235 = scalar_lea.vmem %s0, %s234
      $region44: #{down_block_forward.1} parent=39 // pred_fallthru
        _
    $region40: #{down_block_forward.1} parent=5 // pred_fallthru
      _
    %p236 = scmp.le.s32.totalorder 1, %s13
    %p237 = scmp.lt.s32.totalorder %s13, 3
    %p238 = pnand %p236, %p237
    %p239 = pneg %p238
    // Predicated region
    $region45: #{down_block_forward.1} parent=5 // pred_check
      _
    $region46: #{down_block_forward.1} parent=5 // pred_check_branch
      %241 = sbr.rel (%p238) target = $region48
    $region47: #{down_block_forward.1} parent=5 // pred_region
      %s242 = ssub.s32 %s13, 1
      %p243 = scmp.lt.s32.totalorder %s18, 1
      %s244 = scalar_select %p243, %s18, 1
      %s245 = smul.addr %s244, 8
      %s246 = smul.addr %s245, 4
      %s247 = scalar_lea.vmem %s0, %s246
      %p248 = pneg %p39
      %p249 = pneg %p36
      %p250 = pneg %p60
      %p251 = pneg %p57
      %p252 = pneg %p81
      %p253 = pneg %p78
      %p254 = pneg %p102
      %p255 = pneg %p99
      %p256 = pneg %p123
      %p257 = pneg %p120
      %p258 = pneg %p144
      %p259 = pneg %p141
      %p260 = pneg %p165
      %p261 = pneg %p162
      %p262 = pneg %p191
      %p263 = pneg %p188
      %p264 = scmp.lt.s32.totalorder %s18, 1
      %s265 = scalar_select %p264, %s18, 1
      %s266 = smul.addr %s265, 8
      %s267 = smul.addr %s266, 8
      %s268 = scalar_lea.vmem %s7, %s267
      %p269 = scmp.lt.s32.totalorder %s18, 1
      %s270 = scalar_select %p269, %s18, 1
      %s271 = smul.addr %s270, 8
      %s272 = smul.addr %s271, 4
      %s273 = scalar_lea.vmem %s0, %s272
      %p274 = scmp.lt.s32.totalorder %s18, 1
      %s275 = scalar_select %p274, %s18, 1
      %s276 = smul.addr %s275, 8
      %s277 = smul.addr %s276, 8
      %s278 = scalar_lea.vmem %s7, %s277
      %v280 = vld [vmem:[%s273] sm:$0xf]
      %v281 = vld [vmem:[%s273 + $0x4] sm:$0xf]
      %v282 = vld [vmem:[%s273 + $0x8] sm:$0xf]
      %v283 = vld [vmem:[%s273 + $0xc] sm:$0xf]
      %v284 = vld [vmem:[%s273 + $0x10] sm:$0xf]
      %v285 = vld [vmem:[%s273 + $0x14] sm:$0xf]
      %v286 = vld [vmem:[%s273 + $0x18] sm:$0xf]
      %v287 = vld [vmem:[%s273 + $0x1c] sm:$0xf]
      %v288 = vld [vmem:[%s1] sm:$0xf]
      %v289 = vld [vmem:[%s1 + $0x4] sm:$0xf]
      %v290 = vld [vmem:[%s1 + $0x8] sm:$0xf]
      %v291 = vld [vmem:[%s1 + $0xc] sm:$0xf]
      %v292 = vld [vmem:[%s1 + $0x10] sm:$0xf]
      %v293 = vld [vmem:[%s1 + $0x14] sm:$0xf]
      %v294 = vld [vmem:[%s1 + $0x18] sm:$0xf]
      %v295 = vld [vmem:[%s1 + $0x1c] sm:$0xf]
      %v296 = vld [vmem:[%s1 + $0x20] sm:$0xf]
      %v297 = vld [vmem:[%s1 + $0x24] sm:$0xf]
      %v298 = vld [vmem:[%s1 + $0x28] sm:$0xf]
      %v299 = vld [vmem:[%s1 + $0x2c] sm:$0xf]
      %v300 = vld [vmem:[%s1 + $0x30] sm:$0xf]
      %v301 = vld [vmem:[%s1 + $0x34] sm:$0xf]
      %v302 = vld [vmem:[%s1 + $0x38] sm:$0xf]
      %v303 = vld [vmem:[%s1 + $0x3c] sm:$0xf]
      %v304 = vld [vmem:[%s2] sm:$0x1]
      %v306 = vlaneseq
      %v307 = vshrl.u32 %v306, 7
      %v308 = vsub.s32 0, %v307
      %v309 = vrot.slane %v304, %v308
      %v319 = vunpack.c.l.b16 %v280
      %v320 = vunpack.c.l.b16 %v281
      %v321 = vunpack.c.l.b16 %v282
      %v322 = vunpack.c.l.b16 %v283
      %v323 = vunpack.c.l.b16 %v284
      %v324 = vunpack.c.l.b16 %v285
      %v325 = vunpack.c.l.b16 %v286
      %v326 = vunpack.c.l.b16 %v287
      %v327 = vpack.c.b16 %v320, %v319
      %v328 = vpack.c.b16 %v322, %v321
      %v329 = vpack.c.b16 %v324, %v323
      %v330 = vpack.c.b16 %v326, %v325
      %v351 = vunpack.c.l.b16 %v288
      %v352 = vunpack.c.l.b16 %v289
      %v353 = vunpack.c.l.b16 %v290
      %v354 = vunpack.c.l.b16 %v291
      %v355 = vunpack.c.l.b16 %v292
      %v356 = vunpack.c.l.b16 %v293
      %v357 = vunpack.c.l.b16 %v294
      %v358 = vunpack.c.l.b16 %v295
      %v359 = vunpack.c.l.b16 %v296
      %v360 = vunpack.c.l.b16 %v297
      %v361 = vunpack.c.l.b16 %v298
      %v362 = vunpack.c.l.b16 %v299
      %v363 = vunpack.c.l.b16 %v300
      %v364 = vunpack.c.l.b16 %v301
      %v365 = vunpack.c.l.b16 %v302
      %v366 = vunpack.c.l.b16 %v303
      %v367 = vpack.c.b16 %v352, %v351
      %v368 = vpack.c.b16 %v354, %v353
      %v369 = vpack.c.b16 %v356, %v355
      %v370 = vpack.c.b16 %v358, %v357
      %v371 = vpack.c.b16 %v360, %v359
      %v372 = vpack.c.b16 %v362, %v361
      %v373 = vpack.c.b16 %v364, %v363
      %v374 = vpack.c.b16 %v366, %v365
      %383 = vmatprep.subr.bf16.mxu0 0
      %384 = vmatpush1.bf16.msra.mxu0 %v367
      %385 = vmatprep.subr.bf16.mxu0 0
      %386 = vmatpush1.bf16.msra.mxu0 %v368
      %387 = vmatprep.subr.bf16.mxu0 0
      %388 = vmatpush1.bf16.msra.mxu0 %v369
      %389 = vmatprep.subr.bf16.mxu0 0
      %390 = vmatpush1.bf16.msra.mxu0 %v370
      %391 = vmatprep.subr.bf16.mxu0 0
      %392 = vmatpush1.bf16.msra.mxu0 %v371
      %393 = vmatprep.subr.bf16.mxu0 0
      %394 = vmatpush1.bf16.msra.mxu0 %v372
      %395 = vmatprep.subr.bf16.mxu0 0
      %396 = vmatpush1.bf16.msra.mxu0 %v373
      %397 = vmatprep.subr.bf16.mxu0 0
      %398 = vmatpush1.bf16.msra.mxu0 %v374
      %399 = vmatprep.subr.bf16.mxu0 0
      %400 = vmatpush1.bf16.msra.mxu0 0
      %401 = vmatprep.subr.bf16.mxu0 0
      %402 = vmatpush1.bf16.msra.mxu0 0
      %403 = vmatprep.subr.bf16.mxu0 0
      %404 = vmatpush1.bf16.msra.mxu0 0
      %405 = vmatprep.subr.bf16.mxu0 0
      %406 = vmatpush1.bf16.msra.mxu0 0
      %407 = vmatprep.subr.bf16.mxu0 0
      %408 = vmatpush1.bf16.msra.mxu0 0
      %409 = vmatprep.subr.bf16.mxu0 0
      %410 = vmatpush1.bf16.msra.mxu0 0
      %411 = vmatprep.subr.bf16.mxu0 0
      %412 = vmatpush1.bf16.msra.mxu0 0
      %413 = vmatprep.subr.bf16.mxu0 0
      %414 = vmatpush1.bf16.msra.mxu0 0
      %415 = vmatprep.mubr.bf16.mxu0 0
      %416 = vmatmul.mubr.bf16.gmra.mrb[0].mxu0 %v327
      %v417 = vpop.f32.mrb[0].mxu0
      %v418 = vadd.f32 %v309, %v417
      %v419 = vpop.f32.mrb[0].mxu0
      %v420 = vpop.f32.mrb[0].mxu0
      %v421 = vadd.f32 %v309, %v420
      %v422 = vpop.f32.mrb[0].mxu0
      %423 = vmatprep.mubr.bf16.mxu0 0
      %424 = vmatmul.mubr.bf16.gmra.mrb[0].mxu0 %v328
      %v425 = vpop.f32.mrb[0].mxu0
      %v426 = vadd.f32 %v309, %v425
      %v427 = vpop.f32.mrb[0].mxu0
      %v428 = vpop.f32.mrb[0].mxu0
      %v429 = vadd.f32 %v309, %v428
      %v430 = vpop.f32.mrb[0].mxu0
      %431 = vmatprep.mubr.bf16.mxu0 0
      %432 = vmatmul.mubr.bf16.gmra.mrb[0].mxu0 %v329
      %v433 = vpop.f32.mrb[0].mxu0
      %v434 = vadd.f32 %v309, %v433
      %v435 = vpop.f32.mrb[0].mxu0
      %v436 = vpop.f32.mrb[0].mxu0
      %v437 = vadd.f32 %v309, %v436
      %v438 = vpop.f32.mrb[0].mxu0
      %439 = vmatprep.mubr.bf16.mxu0 0
      %440 = vmatmul.mubr.bf16.gmra.mrb[0].mxu0 %v330
      %v441 = vpop.f32.mrb[0].mxu0
      %v442 = vadd.f32 %v309, %v441
      %v443 = vpop.f32.mrb[0].mxu0
      %v444 = vpop.f32.mrb[0].mxu0
      %v445 = vadd.f32 %v309, %v444
      %v446 = vpop.f32.mrb[0].mxu0
      %447 = vdwg.mxu0
      %448 = vst [vmem:[#allocation2] sm:$0xff] 0.0
      %449 = vst [vmem:[#allocation2 + $0x8] sm:$0x3] 0.0
      %450 = vst [vmem:[#allocation2 + $0x10] sm:$0xff] 0.0
      %451 = vst [vmem:[#allocation2 + $0x18] sm:$0x3] 0.0
      %452 = vst [vmem:[#allocation2 + $0x20] sm:$0xff] 0.0
      %453 = vst [vmem:[#allocation2 + $0x28] sm:$0x3] 0.0
      %454 = vst [vmem:[#allocation2 + $0x30] sm:$0xff] 0.0
      %455 = vst [vmem:[#allocation2 + $0x38] sm:$0x3] 0.0
      %456 = vst [vmem:[#allocation2 + $0x40] sm:$0xff] 0.0
      %457 = vst [vmem:[#allocation2 + $0x48] sm:$0x3] 0.0
      %458 = vst [vmem:[#allocation2 + $0x50] sm:$0xff] 0.0
      %459 = vst [vmem:[#allocation2 + $0x58] sm:$0x3] 0.0
      %460 = vst [vmem:[#allocation2 + $0x60] sm:$0xff] 0.0
      %461 = vst [vmem:[#allocation2 + $0x68] sm:$0x3] 0.0
      %462 = vst [vmem:[#allocation2 + $0x70] sm:$0xff] 0.0
      %463 = vst [vmem:[#allocation2 + $0x78] sm:$0x3] 0.0
      %464 = vst [vmem:[#allocation2 + $0x80] sm:$0xff] 0.0
      %465 = vst [vmem:[#allocation2 + $0x88] sm:$0x3] 0.0
      %466 = vst [vmem:[#allocation2 + $0x90] sm:$0xff] 0.0
      %467 = vst [vmem:[#allocation2 + $0x98] sm:$0x3] 0.0
      %s468 = scalar_lea.vmem [#allocation2], 16
      %469 = vst [vmem:[%s468 + $0x1] sm:$0xff] %v418
      %470 = vst [vmem:[%s468 + $0x11] sm:$0xff] %v421
      %471 = vst [vmem:[%s468 + $0x21] sm:$0xff] %v426
      %472 = vst [vmem:[%s468 + $0x31] sm:$0xff] %v429
      %473 = vst [vmem:[%s468 + $0x41] sm:$0xff] %v434
      %474 = vst [vmem:[%s468 + $0x51] sm:$0xff] %v437
      %475 = vst [vmem:[%s468 + $0x61] sm:$0xff] %v442
      %476 = vst [vmem:[%s468 + $0x71] sm:$0xff] %v445
      %v477 = vld [vmem:[#allocation2] sm:$0xff]
      %v478 = vld [vmem:[#allocation2 + $0x10] sm:$0xff]
      %v479 = vld [vmem:[#allocation2 + $0x20] sm:$0xff]
      %v480 = vld [vmem:[#allocation2 + $0x30] sm:$0xff]
      %v481 = vld [vmem:[#allocation2 + $0x40] sm:$0xff]
      %v482 = vld [vmem:[#allocation2 + $0x50] sm:$0xff]
      %v483 = vld [vmem:[#allocation2 + $0x60] sm:$0xff]
      %v484 = vld [vmem:[#allocation2 + $0x70] sm:$0xff]
      %v485 = vpack.c.bf16 %v478, %v477
      %v486 = vpack.c.bf16 %v480, %v479
      %v487 = vpack.c.bf16 %v482, %v481
      %v488 = vpack.c.bf16 %v484, %v483
      %v489 = vld [vmem:[%s3] sm:$0xf]
      %v490 = vld [vmem:[%s3 + $0x4] sm:$0xf]
      %v491 = vld [vmem:[%s3 + $0x8] sm:$0xf]
      %v492 = vld [vmem:[%s3 + $0xc] sm:$0xf]
      %v493 = vld [vmem:[%s3 + $0x10] sm:$0xf]
      %v494 = vld [vmem:[%s3 + $0x14] sm:$0xf]
      %v495 = vld [vmem:[%s3 + $0x18] sm:$0xf]
      %v496 = vld [vmem:[%s3 + $0x1c] sm:$0xf]
      %v497 = vld [vmem:[%s3 + $0x20] sm:$0xf]
      %v498 = vld [vmem:[%s3 + $0x24] sm:$0xf]
      %v499 = vld [vmem:[%s3 + $0x28] sm:$0xf]
      %v500 = vld [vmem:[%s3 + $0x2c] sm:$0xf]
      %v501 = vld [vmem:[%s3 + $0x30] sm:$0xf]
      %v502 = vld [vmem:[%s3 + $0x34] sm:$0xf]
      %v503 = vld [vmem:[%s3 + $0x38] sm:$0xf]
      %v504 = vld [vmem:[%s3 + $0x3c] sm:$0xf]
      %v505 = vld [vmem:[#allocation2 + $0x1] sm:$0xff]
      %v506 = vld [vmem:[#allocation2 + $0x11] sm:$0xff]
      %v507 = vld [vmem:[#allocation2 + $0x21] sm:$0xff]
      %v508 = vld [vmem:[#allocation2 + $0x31] sm:$0xff]
      %v509 = vld [vmem:[#allocation2 + $0x41] sm:$0xff]
      %v510 = vld [vmem:[#allocation2 + $0x51] sm:$0xff]
      %v511 = vld [vmem:[#allocation2 + $0x61] sm:$0xff]
      %v512 = vld [vmem:[#allocation2 + $0x71] sm:$0xff]
      %v513 = vpack.c.bf16 %v506, %v505
      %v514 = vpack.c.bf16 %v508, %v507
      %v515 = vpack.c.bf16 %v510, %v509
      %v516 = vpack.c.bf16 %v512, %v511
      %s517 = scalar_lea.vmem %s3, 64
      %v518 = vld [vmem:[%s517] sm:$0xf]
      %v519 = vld [vmem:[%s517 + $0x4] sm:$0xf]
      %v520 = vld [vmem:[%s517 + $0x8] sm:$0xf]
      %v521 = vld [vmem:[%s517 + $0xc] sm:$0xf]
      %v522 = vld [vmem:[%s517 + $0x10] sm:$0xf]
      %v523 = vld [vmem:[%s517 + $0x14] sm:$0xf]
      %v524 = vld [vmem:[%s517 + $0x18] sm:$0xf]
      %v525 = vld [vmem:[%s517 + $0x1c] sm:$0xf]
      %v526 = vld [vmem:[%s517 + $0x20] sm:$0xf]
      %v527 = vld [vmem:[%s517 + $0x24] sm:$0xf]
      %v528 = vld [vmem:[%s517 + $0x28] sm:$0xf]
      %v529 = vld [vmem:[%s517 + $0x2c] sm:$0xf]
      %v530 = vld [vmem:[%s517 + $0x30] sm:$0xf]
      %v531 = vld [vmem:[%s517 + $0x34] sm:$0xf]
      %v532 = vld [vmem:[%s517 + $0x38] sm:$0xf]
      %v533 = vld [vmem:[%s517 + $0x3c] sm:$0xf]
      %v550 = vunpack.c.l.b16 %v518
      %v551 = vunpack.c.l.b16 %v519
      %v552 = vunpack.c.l.b16 %v520
      %v553 = vunpack.c.l.b16 %v521
      %v554 = vunpack.c.l.b16 %v522
      %v555 = vunpack.c.l.b16 %v523
      %v556 = vunpack.c.l.b16 %v524
      %v557 = vunpack.c.l.b16 %v525
      %v558 = vunpack.c.l.b16 %v526
      %v559 = vunpack.c.l.b16 %v527
      %v560 = vunpack.c.l.b16 %v528
      %v561 = vunpack.c.l.b16 %v529
      %v562 = vunpack.c.l.b16 %v530
      %v563 = vunpack.c.l.b16 %v531
      %v564 = vunpack.c.l.b16 %v532
      %v565 = vunpack.c.l.b16 %v533
      %v566 = vpack.c.b16 %v551, %v550
      %v567 = vpack.c.b16 %v553, %v552
      %v568 = vpack.c.b16 %v555, %v554
      %v569 = vpack.c.b16 %v557, %v556
      %v570 = vpack.c.b16 %v559, %v558
      %v571 = vpack.c.b16 %v561, %v560
      %v572 = vpack.c.b16 %v563, %v562
      %v573 = vpack.c.b16 %v565, %v564
      %582 = vmatprep.subr.bf16.mxu0 0
      %583 = vmatpush1.bf16.msra.mxu0 %v566
      %584 = vmatprep.subr.bf16.mxu0 0
      %585 = vmatpush1.bf16.msra.mxu0 %v567
      %586 = vmatprep.subr.bf16.mxu0 0
      %587 = vmatpush1.bf16.msra.mxu0 %v568
      %588 = vmatprep.subr.bf16.mxu0 0
      %589 = vmatpush1.bf16.msra.mxu0 %v569
      %590 = vmatprep.subr.bf16.mxu0 0
      %591 = vmatpush1.bf16.msra.mxu0 %v570
      %592 = vmatprep.subr.bf16.mxu0 0
      %593 = vmatpush1.bf16.msra.mxu0 %v571
      %594 = vmatprep.subr.bf16.mxu0 0
      %595 = vmatpush1.bf16.msra.mxu0 %v572
      %596 = vmatprep.subr.bf16.mxu0 0
      %597 = vmatpush1.bf16.msra.mxu0 %v573
      %598 = vmatprep.subr.bf16.mxu0 0
      %599 = vmatpush1.bf16.msra.mxu0 0
      %600 = vmatprep.subr.bf16.mxu0 0
      %601 = vmatpush1.bf16.msra.mxu0 0
      %602 = vmatprep.subr.bf16.mxu0 0
      %603 = vmatpush1.bf16.msra.mxu0 0
      %604 = vmatprep.subr.bf16.mxu0 0
      %605 = vmatpush1.bf16.msra.mxu0 0
      %606 = vmatprep.subr.bf16.mxu0 0
      %607 = vmatpush1.bf16.msra.mxu0 0
      %608 = vmatprep.subr.bf16.mxu0 0
      %609 = vmatpush1.bf16.msra.mxu0 0
      %610 = vmatprep.subr.bf16.mxu0 0
      %611 = vmatpush1.bf16.msra.mxu0 0
      %612 = vmatprep.subr.bf16.mxu0 0
      %613 = vmatpush1.bf16.msra.mxu0 0
      %614 = vmatprep.mubr.bf16.mxu0 0
      %615 = vmatmul.mubr.bf16.gmra.mrb[0].mxu0 %v513
      %v616 = vpop.f32.mrb[0].mxu0
      %v617 = vadd.f32 0.0, %v616
      %v618 = vpop.f32.mrb[0].mxu0
      %v619 = vpop.f32.mrb[0].mxu0
      %v620 = vadd.f32 0.0, %v619
      %v621 = vpop.f32.mrb[0].mxu0
      %622 = vmatprep.mubr.bf16.mxu0 0
      %623 = vmatmul.mubr.bf16.gmra.mrb[0].mxu0 %v514
      %v624 = vpop.f32.mrb[0].mxu0
      %v625 = vadd.f32 0.0, %v624
      %v626 = vpop.f32.mrb[0].mxu0
      %v627 = vpop.f32.mrb[0].mxu0
      %v628 = vadd.f32 0.0, %v627
      %v629 = vpop.f32.mrb[0].mxu0
      %630 = vmatprep.mubr.bf16.mxu0 0
      %631 = vmatmul.mubr.bf16.gmra.mrb[0].mxu0 %v515
      %v632 = vpop.f32.mrb[0].mxu0
      %v633 = vadd.f32 0.0, %v632
      %v634 = vpop.f32.mrb[0].mxu0
      %v635 = vpop.f32.mrb[0].mxu0
      %v636 = vadd.f32 0.0, %v635
      %v637 = vpop.f32.mrb[0].mxu0
      %638 = vmatprep.mubr.bf16.mxu0 0
      %639 = vmatmul.mubr.bf16.gmra.mrb[0].mxu0 %v516
      %v640 = vpop.f32.mrb[0].mxu0
      %v641 = vadd.f32 0.0, %v640
      %v642 = vpop.f32.mrb[0].mxu0
      %v643 = vpop.f32.mrb[0].mxu0
      %v644 = vadd.f32 0.0, %v643
      %v645 = vpop.f32.mrb[0].mxu0
      %646 = vdwg.mxu0
      %v663 = vunpack.c.l.b16 %v489
      %v664 = vunpack.c.l.b16 %v490
      %v665 = vunpack.c.l.b16 %v491
      %v666 = vunpack.c.l.b16 %v492
      %v667 = vunpack.c.l.b16 %v493
      %v668 = vunpack.c.l.b16 %v494
      %v669 = vunpack.c.l.b16 %v495
      %v670 = vunpack.c.l.b16 %v496
      %v671 = vunpack.c.l.b16 %v497
      %v672 = vunpack.c.l.b16 %v498
      %v673 = vunpack.c.l.b16 %v499
      %v674 = vunpack.c.l.b16 %v500
      %v675 = vunpack.c.l.b16 %v501
      %v676 = vunpack.c.l.b16 %v502
      %v677 = vunpack.c.l.b16 %v503
      %v678 = vunpack.c.l.b16 %v504
      %v679 = vpack.c.b16 %v664, %v663
      %v680 = vpack.c.b16 %v666, %v665
      %v681 = vpack.c.b16 %v668, %v667
      %v682 = vpack.c.b16 %v670, %v669
      %v683 = vpack.c.b16 %v672, %v671
      %v684 = vpack.c.b16 %v674, %v673
      %v685 = vpack.c.b16 %v676, %v675
      %v686 = vpack.c.b16 %v678, %v677
      %695 = vmatprep.subr.bf16.mxu0 0
      %696 = vmatpush1.bf16.msra.mxu0 %v679
      %697 = vmatprep.subr.bf16.mxu0 0
      %698 = vmatpush1.bf16.msra.mxu0 %v680
      %699 = vmatprep.subr.bf16.mxu0 0
      %700 = vmatpush1.bf16.msra.mxu0 %v681
      %701 = vmatprep.subr.bf16.mxu0 0
      %702 = vmatpush1.bf16.msra.mxu0 %v682
      %703 = vmatprep.subr.bf16.mxu0 0
      %704 = vmatpush1.bf16.msra.mxu0 %v683
      %705 = vmatprep.subr.bf16.mxu0 0
      %706 = vmatpush1.bf16.msra.mxu0 %v684
      %707 = vmatprep.subr.bf16.mxu0 0
      %708 = vmatpush1.bf16.msra.mxu0 %v685
      %709 = vmatprep.subr.bf16.mxu0 0
      %710 = vmatpush1.bf16.msra.mxu0 %v686
      %711 = vmatprep.subr.bf16.mxu0 0
      %712 = vmatpush1.bf16.msra.mxu0 0
      %713 = vmatprep.subr.bf16.mxu0 0
      %714 = vmatpush1.bf16.msra.mxu0 0
      %715 = vmatprep.subr.bf16.mxu0 0
      %716 = vmatpush1.bf16.msra.mxu0 0
      %717 = vmatprep.subr.bf16.mxu0 0
      %718 = vmatpush1.bf16.msra.mxu0 0
      %719 = vmatprep.subr.bf16.mxu0 0
      %720 = vmatpush1.bf16.msra.mxu0 0
      %721 = vmatprep.subr.bf16.mxu0 0
      %722 = vmatpush1.bf16.msra.mxu0 0
      %723 = vmatprep.subr.bf16.mxu0 0
      %724 = vmatpush1.bf16.msra.mxu0 0
      %725 = vmatprep.subr.bf16.mxu0 0
      %726 = vmatpush1.bf16.msra.mxu0 0
      %727 = vmatprep.mubr.bf16.mxu0 0
      %728 = vmatmul.mubr.bf16.gmra.mrb[0].mxu0 %v485
      %v729 = vpop.f32.mrb[0].mxu0
      %v730 = vadd.f32 %v617, %v729
      %v731 = vpop.f32.mrb[0].mxu0
      %v732 = vpop.f32.mrb[0].mxu0
      %v733 = vadd.f32 %v620, %v732
      %v734 = vpop.f32.mrb[0].mxu0
      %735 = vmatprep.mubr.bf16.mxu0 0
      %736 = vmatmul.mubr.bf16.gmra.mrb[0].mxu0 %v486
      %v737 = vpop.f32.mrb[0].mxu0
      %v738 = vadd.f32 %v625, %v737
      %v739 = vpop.f32.mrb[0].mxu0
      %v740 = vpop.f32.mrb[0].mxu0
      %v741 = vadd.f32 %v628, %v740
      %v742 = vpop.f32.mrb[0].mxu0
      %743 = vmatprep.mubr.bf16.mxu0 0
      %744 = vmatmul.mubr.bf16.gmra.mrb[0].mxu0 %v487
      %v745 = vpop.f32.mrb[0].mxu0
      %v746 = vadd.f32 %v633, %v745
      %v747 = vpop.f32.mrb[0].mxu0
      %v748 = vpop.f32.mrb[0].mxu0
      %v749 = vadd.f32 %v636, %v748
      %v750 = vpop.f32.mrb[0].mxu0
      %751 = vmatprep.mubr.bf16.mxu0 0
      %752 = vmatmul.mubr.bf16.gmra.mrb[0].mxu0 %v488
      %v753 = vpop.f32.mrb[0].mxu0
      %v754 = vadd.f32 %v641, %v753
      %v755 = vpop.f32.mrb[0].mxu0
      %v756 = vpop.f32.mrb[0].mxu0
      %v757 = vadd.f32 %v644, %v756
      %v758 = vpop.f32.mrb[0].mxu0
      %759 = vdwg.mxu0
      %v760 = vld [vmem:[#allocation2 + $0x2] sm:$0xff]
      %v761 = vld [vmem:[#allocation2 + $0x12] sm:$0xff]
      %v762 = vld [vmem:[#allocation2 + $0x22] sm:$0xff]
      %v763 = vld [vmem:[#allocation2 + $0x32] sm:$0xff]
      %v764 = vld [vmem:[#allocation2 + $0x42] sm:$0xff]
      %v765 = vld [vmem:[#allocation2 + $0x52] sm:$0xff]
      %v766 = vld [vmem:[#allocation2 + $0x62] sm:$0xff]
      %v767 = vld [vmem:[#allocation2 + $0x72] sm:$0xff]
      %v768 = vpack.c.bf16 %v761, %v760
      %v769 = vpack.c.bf16 %v763, %v762
      %v770 = vpack.c.bf16 %v765, %v764
      %v771 = vpack.c.bf16 %v767, %v766
      %s772 = scalar_lea.vmem %s3, 128
      %v773 = vld [vmem:[%s772] sm:$0xf]
      %v774 = vld [vmem:[%s772 + $0x4] sm:$0xf]
      %v775 = vld [vmem:[%s772 + $0x8] sm:$0xf]
      %v776 = vld [vmem:[%s772 + $0xc] sm:$0xf]
      %v777 = vld [vmem:[%s772 + $0x10] sm:$0xf]
      %v778 = vld [vmem:[%s772 + $0x14] sm:$0xf]
      %v779 = vld [vmem:[%s772 + $0x18] sm:$0xf]
      %v780 = vld [vmem:[%s772 + $0x1c] sm:$0xf]
      %v781 = vld [vmem:[%s772 + $0x20] sm:$0xf]
      %v782 = vld [vmem:[%s772 + $0x24] sm:$0xf]
      %v783 = vld [vmem:[%s772 + $0x28] sm:$0xf]
      %v784 = vld [vmem:[%s772 + $0x2c] sm:$0xf]
      %v785 = vld [vmem:[%s772 + $0x30] sm:$0xf]
      %v786 = vld [vmem:[%s772 + $0x34] sm:$0xf]
      %v787 = vld [vmem:[%s772 + $0x38] sm:$0xf]
      %v788 = vld [vmem:[%s772 + $0x3c] sm:$0xf]
      %v805 = vunpack.c.l.b16 %v773
      %v806 = vunpack.c.l.b16 %v774
      %v807 = vunpack.c.l.b16 %v775
      %v808 = vunpack.c.l.b16 %v776
      %v809 = vunpack.c.l.b16 %v777
      %v810 = vunpack.c.l.b16 %v778
      %v811 = vunpack.c.l.b16 %v779
      %v812 = vunpack.c.l.b16 %v780
      %v813 = vunpack.c.l.b16 %v781
      %v814 = vunpack.c.l.b16 %v782
      %v815 = vunpack.c.l.b16 %v783
      %v816 = vunpack.c.l.b16 %v784
      %v817 = vunpack.c.l.b16 %v785
      %v818 = vunpack.c.l.b16 %v786
      %v819 = vunpack.c.l.b16 %v787
      %v820 = vunpack.c.l.b16 %v788
      %v821 = vpack.c.b16 %v806, %v805
      %v822 = vpack.c.b16 %v808, %v807
      %v823 = vpack.c.b16 %v810, %v809
      %v824 = vpack.c.b16 %v812, %v811
      %v825 = vpack.c.b16 %v814, %v813
      %v826 = vpack.c.b16 %v816, %v815
      %v827 = vpack.c.b16 %v818, %v817
      %v828 = vpack.c.b16 %v820, %v819
      %837 = vmatprep.subr.bf16.mxu0 0
      %838 = vmatpush1.bf16.msra.mxu0 %v821
      %839 = vmatprep.subr.bf16.mxu0 0
      %840 = vmatpush1.bf16.msra.mxu0 %v822
      %841 = vmatprep.subr.bf16.mxu0 0
      %842 = vmatpush1.bf16.msra.mxu0 %v823
      %843 = vmatprep.subr.bf16.mxu0 0
      %844 = vmatpush1.bf16.msra.mxu0 %v824
      %845 = vmatprep.subr.bf16.mxu0 0
      %846 = vmatpush1.bf16.msra.mxu0 %v825
      %847 = vmatprep.subr.bf16.mxu0 0
      %848 = vmatpush1.bf16.msra.mxu0 %v826
      %849 = vmatprep.subr.bf16.mxu0 0
      %850 = vmatpush1.bf16.msra.mxu0 %v827
      %851 = vmatprep.subr.bf16.mxu0 0
      %852 = vmatpush1.bf16.msra.mxu0 %v828
      %853 = vmatprep.subr.bf16.mxu0 0
      %854 = vmatpush1.bf16.msra.mxu0 0
      %855 = vmatprep.subr.bf16.mxu0 0
      %856 = vmatpush1.bf16.msra.mxu0 0
      %857 = vmatprep.subr.bf16.mxu0 0
      %858 = vmatpush1.bf16.msra.mxu0 0
      %859 = vmatprep.subr.bf16.mxu0 0
      %860 = vmatpush1.bf16.msra.mxu0 0
      %861 = vmatprep.subr.bf16.mxu0 0
      %862 = vmatpush1.bf16.msra.mxu0 0
      %863 = vmatprep.subr.bf16.mxu0 0
      %864 = vmatpush1.bf16.msra.mxu0 0
      %865 = vmatprep.subr.bf16.mxu0 0
      %866 = vmatpush1.bf16.msra.mxu0 0
      %867 = vmatprep.subr.bf16.mxu0 0
      %868 = vmatpush1.bf16.msra.mxu0 0
      %869 = vmatprep.mubr.bf16.mxu0 0
      %870 = vmatmul.mubr.bf16.gmra.mrb[0].mxu0 %v768
      %v871 = vpop.f32.mrb[0].mxu0
      %v872 = vadd.f32 0.0, %v871
      %v873 = vpop.f32.mrb[0].mxu0
      %v874 = vpop.f32.mrb[0].mxu0
      %v875 = vadd.f32 0.0, %v874
      %v876 = vpop.f32.mrb[0].mxu0
      %877 = vmatprep.mubr.bf16.mxu0 0
      %878 = vmatmul.mubr.bf16.gmra.mrb[0].mxu0 %v769
      %v879 = vpop.f32.mrb[0].mxu0
      %v880 = vadd.f32 0.0, %v879
      %v881 = vpop.f32.mrb[0].mxu0
      %v882 = vpop.f32.mrb[0].mxu0
      %v883 = vadd.f32 0.0, %v882
      %v884 = vpop.f32.mrb[0].mxu0
      %885 = vmatprep.mubr.bf16.mxu0 0
      %886 = vmatmul.mubr.bf16.gmra.mrb[0].mxu0 %v770
      %v887 = vpop.f32.mrb[0].mxu0
      %v888 = vadd.f32 0.0, %v887
      %v889 = vpop.f32.mrb[0].mxu0
      %v890 = vpop.f32.mrb[0].mxu0
      %v891 = vadd.f32 0.0, %v890
      %v892 = vpop.f32.mrb[0].mxu0
      %893 = vmatprep.mubr.bf16.mxu0 0
      %894 = vmatmul.mubr.bf16.gmra.mrb[0].mxu0 %v771
      %v895 = vpop.f32.mrb[0].mxu0
      %v896 = vadd.f32 0.0, %v895
      %v897 = vpop.f32.mrb[0].mxu0
      %v898 = vpop.f32.mrb[0].mxu0
      %v899 = vadd.f32 0.0, %v898
      %v900 = vpop.f32.mrb[0].mxu0
      %901 = vdwg.mxu0
      %v902 = vadd.f32 %v730, %v872
      %v903 = vadd.f32 %v733, %v875
      %v904 = vadd.f32 %v738, %v880
      %v905 = vadd.f32 %v741, %v883
      %v906 = vadd.f32 %v746, %v888
      %v907 = vadd.f32 %v749, %v891
      %v908 = vadd.f32 %v754, %v896
      %v909 = vadd.f32 %v757, %v899
      %v910 = vld [vmem:[%s468] sm:$0xff]
      %v911 = vld [vmem:[%s468 + $0x10] sm:$0xff]
      %v912 = vld [vmem:[%s468 + $0x20] sm:$0xff]
      %v913 = vld [vmem:[%s468 + $0x30] sm:$0xff]
      %v914 = vld [vmem:[%s468 + $0x40] sm:$0xff]
      %v915 = vld [vmem:[%s468 + $0x50] sm:$0xff]
      %v916 = vld [vmem:[%s468 + $0x60] sm:$0xff]
      %v917 = vld [vmem:[%s468 + $0x70] sm:$0xff]
      %v918 = vpack.c.bf16 %v911, %v910
      %v919 = vpack.c.bf16 %v913, %v912
      %v920 = vpack.c.bf16 %v915, %v914
      %v921 = vpack.c.bf16 %v917, %v916
      %s922 = scalar_lea.vmem %s3, 192
      %v923 = vld [vmem:[%s922] sm:$0xf]
      %v924 = vld [vmem:[%s922 + $0x4] sm:$0xf]
      %v925 = vld [vmem:[%s922 + $0x8] sm:$0xf]
      %v926 = vld [vmem:[%s922 + $0xc] sm:$0xf]
      %v927 = vld [vmem:[%s922 + $0x10] sm:$0xf]
      %v928 = vld [vmem:[%s922 + $0x14] sm:$0xf]
      %v929 = vld [vmem:[%s922 + $0x18] sm:$0xf]
      %v930 = vld [vmem:[%s922 + $0x1c] sm:$0xf]
      %v931 = vld [vmem:[%s922 + $0x20] sm:$0xf]
      %v932 = vld [vmem:[%s922 + $0x24] sm:$0xf]
      %v933 = vld [vmem:[%s922 + $0x28] sm:$0xf]
      %v934 = vld [vmem:[%s922 + $0x2c] sm:$0xf]
      %v935 = vld [vmem:[%s922 + $0x30] sm:$0xf]
      %v936 = vld [vmem:[%s922 + $0x34] sm:$0xf]
      %v937 = vld [vmem:[%s922 + $0x38] sm:$0xf]
      %v938 = vld [vmem:[%s922 + $0x3c] sm:$0xf]
      %v955 = vunpack.c.l.b16 %v923
      %v956 = vunpack.c.l.b16 %v924
      %v957 = vunpack.c.l.b16 %v925
      %v958 = vunpack.c.l.b16 %v926
      %v959 = vunpack.c.l.b16 %v927
      %v960 = vunpack.c.l.b16 %v928
      %v961 = vunpack.c.l.b16 %v929
      %v962 = vunpack.c.l.b16 %v930
      %v963 = vunpack.c.l.b16 %v931
      %v964 = vunpack.c.l.b16 %v932
      %v965 = vunpack.c.l.b16 %v933
      %v966 = vunpack.c.l.b16 %v934
      %v967 = vunpack.c.l.b16 %v935
      %v968 = vunpack.c.l.b16 %v936
      %v969 = vunpack.c.l.b16 %v937
      %v970 = vunpack.c.l.b16 %v938
      %v971 = vpack.c.b16 %v956, %v955
      %v972 = vpack.c.b16 %v958, %v957
      %v973 = vpack.c.b16 %v960, %v959
      %v974 = vpack.c.b16 %v962, %v961
      %v975 = vpack.c.b16 %v964, %v963
      %v976 = vpack.c.b16 %v966, %v965
      %v977 = vpack.c.b16 %v968, %v967
      %v978 = vpack.c.b16 %v970, %v969
      %987 = vmatprep.subr.bf16.mxu0 0
      %988 = vmatpush1.bf16.msra.mxu0 %v971
      %989 = vmatprep.subr.bf16.mxu0 0
      %990 = vmatpush1.bf16.msra.mxu0 %v972
      %991 = vmatprep.subr.bf16.mxu0 0
      %992 = vmatpush1.bf16.msra.mxu0 %v973
      %993 = vmatprep.subr.bf16.mxu0 0
      %994 = vmatpush1.bf16.msra.mxu0 %v974
      %995 = vmatprep.subr.bf16.mxu0 0
      %996 = vmatpush1.bf16.msra.mxu0 %v975
      %997 = vmatprep.subr.bf16.mxu0 0
      %998 = vmatpush1.bf16.msra.mxu0 %v976
      %999 = vmatprep.subr.bf16.mxu0 0
      %1000 = vmatpush1.bf16.msra.mxu0 %v977
      %1001 = vmatprep.subr.bf16.mxu0 0
      %1002 = vmatpush1.bf16.msra.mxu0 %v978
      %1003 = vmatprep.subr.bf16.mxu0 0
      %1004 = vmatpush1.bf16.msra.mxu0 0
      %1005 = vmatprep.subr.bf16.mxu0 0
      %1006 = vmatpush1.bf16.msra.mxu0 0
      %1007 = vmatprep.subr.bf16.mxu0 0
      %1008 = vmatpush1.bf16.msra.mxu0 0
      %1009 = vmatprep.subr.bf16.mxu0 0
      %1010 = vmatpush1.bf16.msra.mxu0 0
      %1011 = vmatprep.subr.bf16.mxu0 0
      %1012 = vmatpush1.bf16.msra.mxu0 0
      %1013 = vmatprep.subr.bf16.mxu0 0
      %1014 = vmatpush1.bf16.msra.mxu0 0
      %1015 = vmatprep.subr.bf16.mxu0 0
      %1016 = vmatpush1.bf16.msra.mxu0 0
      %1017 = vmatprep.subr.bf16.mxu0 0
      %1018 = vmatpush1.bf16.msra.mxu0 0
      %1019 = vmatprep.mubr.bf16.mxu0 0
      %1020 = vmatmul.mubr.bf16.gmra.mrb[0].mxu0 %v918
      %v1021 = vpop.f32.mrb[0].mxu0
      %v1022 = vadd.f32 0.0, %v1021
      %v1023 = vpop.f32.mrb[0].mxu0
      %v1024 = vpop.f32.mrb[0].mxu0
      %v1025 = vadd.f32 0.0, %v1024
      %v1026 = vpop.f32.mrb[0].mxu0
      %1027 = vmatprep.mubr.bf16.mxu0 0
      %1028 = vmatmul.mubr.bf16.gmra.mrb[0].mxu0 %v919
      %v1029 = vpop.f32.mrb[0].mxu0
      %v1030 = vadd.f32 0.0, %v1029
      %v1031 = vpop.f32.mrb[0].mxu0
      %v1032 = vpop.f32.mrb[0].mxu0
      %v1033 = vadd.f32 0.0, %v1032
      %v1034 = vpop.f32.mrb[0].mxu0
      %1035 = vmatprep.mubr.bf16.mxu0 0
      %1036 = vmatmul.mubr.bf16.gmra.mrb[0].mxu0 %v920
      %v1037 = vpop.f32.mrb[0].mxu0
      %v1038 = vadd.f32 0.0, %v1037
      %v1039 = vpop.f32.mrb[0].mxu0
      %v1040 = vpop.f32.mrb[0].mxu0
      %v1041 = vadd.f32 0.0, %v1040
      %v1042 = vpop.f32.mrb[0].mxu0
      %1043 = vmatprep.mubr.bf16.mxu0 0
      %1044 = vmatmul.mubr.bf16.gmra.mrb[0].mxu0 %v921
      %v1045 = vpop.f32.mrb[0].mxu0
      %v1046 = vadd.f32 0.0, %v1045
      %v1047 = vpop.f32.mrb[0].mxu0
      %v1048 = vpop.f32.mrb[0].mxu0
      %v1049 = vadd.f32 0.0, %v1048
      %v1050 = vpop.f32.mrb[0].mxu0
      %1051 = vdwg.mxu0
      %v1052 = vadd.f32 %v902, %v1022
      %v1053 = vadd.f32 %v903, %v1025
      %v1054 = vadd.f32 %v904, %v1030
      %v1055 = vadd.f32 %v905, %v1033
      %v1056 = vadd.f32 %v906, %v1038
      %v1057 = vadd.f32 %v907, %v1041
      %v1058 = vadd.f32 %v908, %v1046
      %v1059 = vadd.f32 %v909, %v1049
      %v1060 = vld [vmem:[%s468 + $0x1] sm:$0xff]
      %v1061 = vld [vmem:[%s468 + $0x11] sm:$0xff]
      %v1062 = vld [vmem:[%s468 + $0x21] sm:$0xff]
      %v1063 = vld [vmem:[%s468 + $0x31] sm:$0xff]
      %v1064 = vld [vmem:[%s468 + $0x41] sm:$0xff]
      %v1065 = vld [vmem:[%s468 + $0x51] sm:$0xff]
      %v1066 = vld [vmem:[%s468 + $0x61] sm:$0xff]
      %v1067 = vld [vmem:[%s468 + $0x71] sm:$0xff]
      %v1068 = vpack.c.bf16 %v1061, %v1060
      %v1069 = vpack.c.bf16 %v1063, %v1062
      %v1070 = vpack.c.bf16 %v1065, %v1064
      %v1071 = vpack.c.bf16 %v1067, %v1066
      %s1072 = scalar_lea.vmem %s3, 256
      %v1073 = vld [vmem:[%s1072] sm:$0xf]
      %v1074 = vld [vmem:[%s1072 + $0x4] sm:$0xf]
      %v1075 = vld [vmem:[%s1072 + $0x8] sm:$0xf]
      %v1076 = vld [vmem:[%s1072 + $0xc] sm:$0xf]
      %v1077 = vld [vmem:[%s1072 + $0x10] sm:$0xf]
      %v1078 = vld [vmem:[%s1072 + $0x14] sm:$0xf]
      %v1079 = vld [vmem:[%s1072 + $0x18] sm:$0xf]
      %v1080 = vld [vmem:[%s1072 + $0x1c] sm:$0xf]
      %v1081 = vld [vmem:[%s1072 + $0x20] sm:$0xf]
      %v1082 = vld [vmem:[%s1072 + $0x24] sm:$0xf]
      %v1083 = vld [vmem:[%s1072 + $0x28] sm:$0xf]
      %v1084 = vld [vmem:[%s1072 + $0x2c] sm:$0xf]
      %v1085 = vld [vmem:[%s1072 + $0x30] sm:$0xf]
      %v1086 = vld [vmem:[%s1072 + $0x34] sm:$0xf]
      %v1087 = vld [vmem:[%s1072 + $0x38] sm:$0xf]
      %v1088 = vld [vmem:[%s1072 + $0x3c] sm:$0xf]
      %v1105 = vunpack.c.l.b16 %v1073
      %v1106 = vunpack.c.l.b16 %v1074
      %v1107 = vunpack.c.l.b16 %v1075
      %v1108 = vunpack.c.l.b16 %v1076
      %v1109 = vunpack.c.l.b16 %v1077
      %v1110 = vunpack.c.l.b16 %v1078
      %v1111 = vunpack.c.l.b16 %v1079
      %v1112 = vunpack.c.l.b16 %v1080
      %v1113 = vunpack.c.l.b16 %v1081
      %v1114 = vunpack.c.l.b16 %v1082
      %v1115 = vunpack.c.l.b16 %v1083
      %v1116 = vunpack.c.l.b16 %v1084
      %v1117 = vunpack.c.l.b16 %v1085
      %v1118 = vunpack.c.l.b16 %v1086
      %v1119 = vunpack.c.l.b16 %v1087
      %v1120 = vunpack.c.l.b16 %v1088
      %v1121 = vpack.c.b16 %v1106, %v1105
      %v1122 = vpack.c.b16 %v1108, %v1107
      %v1123 = vpack.c.b16 %v1110, %v1109
      %v1124 = vpack.c.b16 %v1112, %v1111
      %v1125 = vpack.c.b16 %v1114, %v1113
      %v1126 = vpack.c.b16 %v1116, %v1115
      %v1127 = vpack.c.b16 %v1118, %v1117
      %v1128 = vpack.c.b16 %v1120, %v1119
      %1137 = vmatprep.subr.bf16.mxu0 0
      %1138 = vmatpush1.bf16.msra.mxu0 %v1121
      %1139 = vmatprep.subr.bf16.mxu0 0
      %1140 = vmatpush1.bf16.msra.mxu0 %v1122
      %1141 = vmatprep.subr.bf16.mxu0 0
      %1142 = vmatpush1.bf16.msra.mxu0 %v1123
      %1143 = vmatprep.subr.bf16.mxu0 0
      %1144 = vmatpush1.bf16.msra.mxu0 %v1124
      %1145 = vmatprep.subr.bf16.mxu0 0
      %1146 = vmatpush1.bf16.msra.mxu0 %v1125
      %1147 = vmatprep.subr.bf16.mxu0 0
      %1148 = vmatpush1.bf16.msra.mxu0 %v1126
      %1149 = vmatprep.subr.bf16.mxu0 0
      %1150 = vmatpush1.bf16.msra.mxu0 %v1127
      %1151 = vmatprep.subr.bf16.mxu0 0
      %1152 = vmatpush1.bf16.msra.mxu0 %v1128
      %1153 = vmatprep.subr.bf16.mxu0 0
      %1154 = vmatpush1.bf16.msra.mxu0 0
      %1155 = vmatprep.subr.bf16.mxu0 0
      %1156 = vmatpush1.bf16.msra.mxu0 0
      %1157 = vmatprep.subr.bf16.mxu0 0
      %1158 = vmatpush1.bf16.msra.mxu0 0
      %1159 = vmatprep.subr.bf16.mxu0 0
      %1160 = vmatpush1.bf16.msra.mxu0 0
      %1161 = vmatprep.subr.bf16.mxu0 0
      %1162 = vmatpush1.bf16.msra.mxu0 0
      %1163 = vmatprep.subr.bf16.mxu0 0
      %1164 = vmatpush1.bf16.msra.mxu0 0
      %1165 = vmatprep.subr.bf16.mxu0 0
      %1166 = vmatpush1.bf16.msra.mxu0 0
      %1167 = vmatprep.subr.bf16.mxu0 0
      %1168 = vmatpush1.bf16.msra.mxu0 0
      %1169 = vmatprep.mubr.bf16.mxu0 0
      %1170 = vmatmul.mubr.bf16.gmra.mrb[0].mxu0 %v1068
      %v1171 = vpop.f32.mrb[0].mxu0
      %v1172 = vadd.f32 0.0, %v1171
      %v1173 = vpop.f32.mrb[0].mxu0
      %v1174 = vpop.f32.mrb[0].mxu0
      %v1175 = vadd.f32 0.0, %v1174
      %v1176 = vpop.f32.mrb[0].mxu0
      %1177 = vmatprep.mubr.bf16.mxu0 0
      %1178 = vmatmul.mubr.bf16.gmra.mrb[0].mxu0 %v1069
      %v1179 = vpop.f32.mrb[0].mxu0
      %v1180 = vadd.f32 0.0, %v1179
      %v1181 = vpop.f32.mrb[0].mxu0
      %v1182 = vpop.f32.mrb[0].mxu0
      %v1183 = vadd.f32 0.0, %v1182
      %v1184 = vpop.f32.mrb[0].mxu0
      %1185 = vmatprep.mubr.bf16.mxu0 0
      %1186 = vmatmul.mubr.bf16.gmra.mrb[0].mxu0 %v1070
      %v1187 = vpop.f32.mrb[0].mxu0
      %v1188 = vadd.f32 0.0, %v1187
      %v1189 = vpop.f32.mrb[0].mxu0
      %v1190 = vpop.f32.mrb[0].mxu0
      %v1191 = vadd.f32 0.0, %v1190
      %v1192 = vpop.f32.mrb[0].mxu0
      %1193 = vmatprep.mubr.bf16.mxu0 0
      %1194 = vmatmul.mubr.bf16.gmra.mrb[0].mxu0 %v1071
      %v1195 = vpop.f32.mrb[0].mxu0
      %v1196 = vadd.f32 0.0, %v1195
      %v1197 = vpop.f32.mrb[0].mxu0
      %v1198 = vpop.f32.mrb[0].mxu0
      %v1199 = vadd.f32 0.0, %v1198
      %v1200 = vpop.f32.mrb[0].mxu0
      %1201 = vdwg.mxu0
      %v1202 = vadd.f32 %v1052, %v1172
      %v1203 = vadd.f32 %v1053, %v1175
      %v1204 = vadd.f32 %v1054, %v1180
      %v1205 = vadd.f32 %v1055, %v1183
      %v1206 = vadd.f32 %v1056, %v1188
      %v1207 = vadd.f32 %v1057, %v1191
      %v1208 = vadd.f32 %v1058, %v1196
      %v1209 = vadd.f32 %v1059, %v1199
      %v1210 = vld [vmem:[%s468 + $0x2] sm:$0xff]
      %v1211 = vld [vmem:[%s468 + $0x12] sm:$0xff]
      %v1212 = vld [vmem:[%s468 + $0x22] sm:$0xff]
      %v1213 = vld [vmem:[%s468 + $0x32] sm:$0xff]
      %v1214 = vld [vmem:[%s468 + $0x42] sm:$0xff]
      %v1215 = vld [vmem:[%s468 + $0x52] sm:$0xff]
      %v1216 = vld [vmem:[%s468 + $0x62] sm:$0xff]
      %v1217 = vld [vmem:[%s468 + $0x72] sm:$0xff]
      %v1218 = vpack.c.bf16 %v1211, %v1210
      %v1219 = vpack.c.bf16 %v1213, %v1212
      %v1220 = vpack.c.bf16 %v1215, %v1214
      %v1221 = vpack.c.bf16 %v1217, %v1216
      %s1222 = scalar_lea.vmem %s3, 320
      %v1223 = vld [vmem:[%s1222] sm:$0xf]
      %v1224 = vld [vmem:[%s1222 + $0x4] sm:$0xf]
      %v1225 = vld [vmem:[%s1222 + $0x8] sm:$0xf]
      %v1226 = vld [vmem:[%s1222 + $0xc] sm:$0xf]
      %v1227 = vld [vmem:[%s1222 + $0x10] sm:$0xf]
      %v1228 = vld [vmem:[%s1222 + $0x14] sm:$0xf]
      %v1229 = vld [vmem:[%s1222 + $0x18] sm:$0xf]
      %v1230 = vld [vmem:[%s1222 + $0x1c] sm:$0xf]
      %v1231 = vld [vmem:[%s1222 + $0x20] sm:$0xf]
      %v1232 = vld [vmem:[%s1222 + $0x24] sm:$0xf]
      %v1233 = vld [vmem:[%s1222 + $0x28] sm:$0xf]
      %v1234 = vld [vmem:[%s1222 + $0x2c] sm:$0xf]
      %v1235 = vld [vmem:[%s1222 + $0x30] sm:$0xf]
      %v1236 = vld [vmem:[%s1222 + $0x34] sm:$0xf]
      %v1237 = vld [vmem:[%s1222 + $0x38] sm:$0xf]
      %v1238 = vld [vmem:[%s1222 + $0x3c] sm:$0xf]
      %v1255 = vunpack.c.l.b16 %v1223
      %v1256 = vunpack.c.l.b16 %v1224
      %v1257 = vunpack.c.l.b16 %v1225
      %v1258 = vunpack.c.l.b16 %v1226
      %v1259 = vunpack.c.l.b16 %v1227
      %v1260 = vunpack.c.l.b16 %v1228
      %v1261 = vunpack.c.l.b16 %v1229
      %v1262 = vunpack.c.l.b16 %v1230
      %v1263 = vunpack.c.l.b16 %v1231
      %v1264 = vunpack.c.l.b16 %v1232
      %v1265 = vunpack.c.l.b16 %v1233
      %v1266 = vunpack.c.l.b16 %v1234
      %v1267 = vunpack.c.l.b16 %v1235
      %v1268 = vunpack.c.l.b16 %v1236
      %v1269 = vunpack.c.l.b16 %v1237
      %v1270 = vunpack.c.l.b16 %v1238
      %v1271 = vpack.c.b16 %v1256, %v1255
      %v1272 = vpack.c.b16 %v1258, %v1257
      %v1273 = vpack.c.b16 %v1260, %v1259
      %v1274 = vpack.c.b16 %v1262, %v1261
      %v1275 = vpack.c.b16 %v1264, %v1263
      %v1276 = vpack.c.b16 %v1266, %v1265
      %v1277 = vpack.c.b16 %v1268, %v1267
      %v1278 = vpack.c.b16 %v1270, %v1269
      %1287 = vmatprep.subr.bf16.mxu0 0
      %1288 = vmatpush1.bf16.msra.mxu0 %v1271
      %1289 = vmatprep.subr.bf16.mxu0 0
      %1290 = vmatpush1.bf16.msra.mxu0 %v1272
      %1291 = vmatprep.subr.bf16.mxu0 0
      %1292 = vmatpush1.bf16.msra.mxu0 %v1273
      %1293 = vmatprep.subr.bf16.mxu0 0
      %1294 = vmatpush1.bf16.msra.mxu0 %v1274
      %1295 = vmatprep.subr.bf16.mxu0 0
      %1296 = vmatpush1.bf16.msra.mxu0 %v1275
      %1297 = vmatprep.subr.bf16.mxu0 0
      %1298 = vmatpush1.bf16.msra.mxu0 %v1276
      %1299 = vmatprep.subr.bf16.mxu0 0
      %1300 = vmatpush1.bf16.msra.mxu0 %v1277
      %1301 = vmatprep.subr.bf16.mxu0 0
      %1302 = vmatpush1.bf16.msra.mxu0 %v1278
      %1303 = vmatprep.subr.bf16.mxu0 0
      %1304 = vmatpush1.bf16.msra.mxu0 0
      %1305 = vmatprep.subr.bf16.mxu0 0
      %1306 = vmatpush1.bf16.msra.mxu0 0
      %1307 = vmatprep.subr.bf16.mxu0 0
      %1308 = vmatpush1.bf16.msra.mxu0 0
      %1309 = vmatprep.subr.bf16.mxu0 0
      %1310 = vmatpush1.bf16.msra.mxu0 0
      %1311 = vmatprep.subr.bf16.mxu0 0
      %1312 = vmatpush1.bf16.msra.mxu0 0
      %1313 = vmatprep.subr.bf16.mxu0 0
      %1314 = vmatpush1.bf16.msra.mxu0 0
      %1315 = vmatprep.subr.bf16.mxu0 0
      %1316 = vmatpush1.bf16.msra.mxu0 0
      %1317 = vmatprep.subr.bf16.mxu0 0
      %1318 = vmatpush1.bf16.msra.mxu0 0
      %1319 = vmatprep.mubr.bf16.mxu0 0
      %1320 = vmatmul.mubr.bf16.gmra.mrb[0].mxu0 %v1218
      %v1321 = vpop.f32.mrb[0].mxu0
      %v1322 = vadd.f32 0.0, %v1321
      %v1323 = vpop.f32.mrb[0].mxu0
      %v1324 = vpop.f32.mrb[0].mxu0
      %v1325 = vadd.f32 0.0, %v1324
      %v1326 = vpop.f32.mrb[0].mxu0
      %1327 = vmatprep.mubr.bf16.mxu0 0
      %1328 = vmatmul.mubr.bf16.gmra.mrb[0].mxu0 %v1219
      %v1329 = vpop.f32.mrb[0].mxu0
      %v1330 = vadd.f32 0.0, %v1329
      %v1331 = vpop.f32.mrb[0].mxu0
      %v1332 = vpop.f32.mrb[0].mxu0
      %v1333 = vadd.f32 0.0, %v1332
      %v1334 = vpop.f32.mrb[0].mxu0
      %1335 = vmatprep.mubr.bf16.mxu0 0
      %1336 = vmatmul.mubr.bf16.gmra.mrb[0].mxu0 %v1220
      %v1337 = vpop.f32.mrb[0].mxu0
      %v1338 = vadd.f32 0.0, %v1337
      %v1339 = vpop.f32.mrb[0].mxu0
      %v1340 = vpop.f32.mrb[0].mxu0
      %v1341 = vadd.f32 0.0, %v1340
      %v1342 = vpop.f32.mrb[0].mxu0
      %1343 = vmatprep.mubr.bf16.mxu0 0
      %1344 = vmatmul.mubr.bf16.gmra.mrb[0].mxu0 %v1221
      %v1345 = vpop.f32.mrb[0].mxu0
      %v1346 = vadd.f32 0.0, %v1345
      %v1347 = vpop.f32.mrb[0].mxu0
      %v1348 = vpop.f32.mrb[0].mxu0
      %v1349 = vadd.f32 0.0, %v1348
      %v1350 = vpop.f32.mrb[0].mxu0
      %1351 = vdwg.mxu0
      %v1352 = vadd.f32 %v1202, %v1322
      %v1353 = vadd.f32 %v1203, %v1325
      %v1354 = vadd.f32 %v1204, %v1330
      %v1355 = vadd.f32 %v1205, %v1333
      %v1356 = vadd.f32 %v1206, %v1338
      %v1357 = vadd.f32 %v1207, %v1341
      %v1358 = vadd.f32 %v1208, %v1346
      %v1359 = vadd.f32 %v1209, %v1349
      %s1360 = scalar_lea.vmem [#allocation2], 32
      %v1361 = vld [vmem:[%s1360] sm:$0xff]
      %v1362 = vld [vmem:[%s1360 + $0x10] sm:$0xff]
      %v1363 = vld [vmem:[%s1360 + $0x20] sm:$0xff]
      %v1364 = vld [vmem:[%s1360 + $0x30] sm:$0xff]
      %v1365 = vld [vmem:[%s1360 + $0x40] sm:$0xff]
      %v1366 = vld [vmem:[%s1360 + $0x50] sm:$0xff]
      %v1367 = vld [vmem:[%s1360 + $0x60] sm:$0xff]
      %v1368 = vld [vmem:[%s1360 + $0x70] sm:$0xff]
      %v1369 = vpack.c.bf16 %v1362, %v1361
      %v1370 = vpack.c.bf16 %v1364, %v1363
      %v1371 = vpack.c.bf16 %v1366, %v1365
      %v1372 = vpack.c.bf16 %v1368, %v1367
      %s1373 = scalar_lea.vmem %s3, 384
      %v1374 = vld [vmem:[%s1373] sm:$0xf]
      %v1375 = vld [vmem:[%s1373 + $0x4] sm:$0xf]
      %v1376 = vld [vmem:[%s1373 + $0x8] sm:$0xf]
      %v1377 = vld [vmem:[%s1373 + $0xc] sm:$0xf]
      %v1378 = vld [vmem:[%s1373 + $0x10] sm:$0xf]
      %v1379 = vld [vmem:[%s1373 + $0x14] sm:$0xf]
      %v1380 = vld [vmem:[%s1373 + $0x18] sm:$0xf]
      %v1381 = vld [vmem:[%s1373 + $0x1c] sm:$0xf]
      %v1382 = vld [vmem:[%s1373 + $0x20] sm:$0xf]
      %v1383 = vld [vmem:[%s1373 + $0x24] sm:$0xf]
      %v1384 = vld [vmem:[%s1373 + $0x28] sm:$0xf]
      %v1385 = vld [vmem:[%s1373 + $0x2c] sm:$0xf]
      %v1386 = vld [vmem:[%s1373 + $0x30] sm:$0xf]
      %v1387 = vld [vmem:[%s1373 + $0x34] sm:$0xf]
      %v1388 = vld [vmem:[%s1373 + $0x38] sm:$0xf]
      %v1389 = vld [vmem:[%s1373 + $0x3c] sm:$0xf]
      %v1406 = vunpack.c.l.b16 %v1374
      %v1407 = vunpack.c.l.b16 %v1375
      %v1408 = vunpack.c.l.b16 %v1376
      %v1409 = vunpack.c.l.b16 %v1377
      %v1410 = vunpack.c.l.b16 %v1378
      %v1411 = vunpack.c.l.b16 %v1379
      %v1412 = vunpack.c.l.b16 %v1380
      %v1413 = vunpack.c.l.b16 %v1381
      %v1414 = vunpack.c.l.b16 %v1382
      %v1415 = vunpack.c.l.b16 %v1383
      %v1416 = vunpack.c.l.b16 %v1384
      %v1417 = vunpack.c.l.b16 %v1385
      %v1418 = vunpack.c.l.b16 %v1386
      %v1419 = vunpack.c.l.b16 %v1387
      %v1420 = vunpack.c.l.b16 %v1388
      %v1421 = vunpack.c.l.b16 %v1389
      %v1422 = vpack.c.b16 %v1407, %v1406
      %v1423 = vpack.c.b16 %v1409, %v1408
      %v1424 = vpack.c.b16 %v1411, %v1410
      %v1425 = vpack.c.b16 %v1413, %v1412
      %v1426 = vpack.c.b16 %v1415, %v1414
      %v1427 = vpack.c.b16 %v1417, %v1416
      %v1428 = vpack.c.b16 %v1419, %v1418
      %v1429 = vpack.c.b16 %v1421, %v1420
      %1438 = vmatprep.subr.bf16.mxu0 0
      %1439 = vmatpush1.bf16.msra.mxu0 %v1422
      %1440 = vmatprep.subr.bf16.mxu0 0
      %1441 = vmatpush1.bf16.msra.mxu0 %v1423
      %1442 = vmatprep.subr.bf16.mxu0 0
      %1443 = vmatpush1.bf16.msra.mxu0 %v1424
      %1444 = vmatprep.subr.bf16.mxu0 0
      %1445 = vmatpush1.bf16.msra.mxu0 %v1425
      %1446 = vmatprep.subr.bf16.mxu0 0
      %1447 = vmatpush1.bf16.msra.mxu0 %v1426
      %1448 = vmatprep.subr.bf16.mxu0 0
      %1449 = vmatpush1.bf16.msra.mxu0 %v1427
      %1450 = vmatprep.subr.bf16.mxu0 0
      %1451 = vmatpush1.bf16.msra.mxu0 %v1428
      %1452 = vmatprep.subr.bf16.mxu0 0
      %1453 = vmatpush1.bf16.msra.mxu0 %v1429
      %1454 = vmatprep.subr.bf16.mxu0 0
      %1455 = vmatpush1.bf16.msra.mxu0 0
      %1456 = vmatprep.subr.bf16.mxu0 0
      %1457 = vmatpush1.bf16.msra.mxu0 0
      %1458 = vmatprep.subr.bf16.mxu0 0
      %1459 = vmatpush1.bf16.msra.mxu0 0
      %1460 = vmatprep.subr.bf16.mxu0 0
      %1461 = vmatpush1.bf16.msra.mxu0 0
      %1462 = vmatprep.subr.bf16.mxu0 0
      %1463 = vmatpush1.bf16.msra.mxu0 0
      %1464 = vmatprep.subr.bf16.mxu0 0
      %1465 = vmatpush1.bf16.msra.mxu0 0
      %1466 = vmatprep.subr.bf16.mxu0 0
      %1467 = vmatpush1.bf16.msra.mxu0 0
      %1468 = vmatprep.subr.bf16.mxu0 0
      %1469 = vmatpush1.bf16.msra.mxu0 0
      %1470 = vmatprep.mubr.bf16.mxu0 0
      %1471 = vmatmul.mubr.bf16.gmra.mrb[0].mxu0 %v1369
      %v1472 = vpop.f32.mrb[0].mxu0
      %v1473 = vadd.f32 0.0, %v1472
      %v1474 = vpop.f32.mrb[0].mxu0
      %v1475 = vpop.f32.mrb[0].mxu0
      %v1476 = vadd.f32 0.0, %v1475
      %v1477 = vpop.f32.mrb[0].mxu0
      %1478 = vmatprep.mubr.bf16.mxu0 0
      %1479 = vmatmul.mubr.bf16.gmra.mrb[0].mxu0 %v1370
      %v1480 = vpop.f32.mrb[0].mxu0
      %v1481 = vadd.f32 0.0, %v1480
      %v1482 = vpop.f32.mrb[0].mxu0
      %v1483 = vpop.f32.mrb[0].mxu0
      %v1484 = vadd.f32 0.0, %v1483
      %v1485 = vpop.f32.mrb[0].mxu0
      %1486 = vmatprep.mubr.bf16.mxu0 0
      %1487 = vmatmul.mubr.bf16.gmra.mrb[0].mxu0 %v1371
      %v1488 = vpop.f32.mrb[0].mxu0
      %v1489 = vadd.f32 0.0, %v1488
      %v1490 = vpop.f32.mrb[0].mxu0
      %v1491 = vpop.f32.mrb[0].mxu0
      %v1492 = vadd.f32 0.0, %v1491
      %v1493 = vpop.f32.mrb[0].mxu0
      %1494 = vmatprep.mubr.bf16.mxu0 0
      %1495 = vmatmul.mubr.bf16.gmra.mrb[0].mxu0 %v1372
      %v1496 = vpop.f32.mrb[0].mxu0
      %v1497 = vadd.f32 0.0, %v1496
      %v1498 = vpop.f32.mrb[0].mxu0
      %v1499 = vpop.f32.mrb[0].mxu0
      %v1500 = vadd.f32 0.0, %v1499
      %v1501 = vpop.f32.mrb[0].mxu0
      %1502 = vdwg.mxu0
      %v1503 = vadd.f32 %v1352, %v1473
      %v1504 = vadd.f32 %v1353, %v1476
      %v1505 = vadd.f32 %v1354, %v1481
      %v1506 = vadd.f32 %v1355, %v1484
      %v1507 = vadd.f32 %v1356, %v1489
      %v1508 = vadd.f32 %v1357, %v1492
      %v1509 = vadd.f32 %v1358, %v1497
      %v1510 = vadd.f32 %v1359, %v1500
      %v1511 = vld [vmem:[%s1360 + $0x1] sm:$0xff]
      %v1512 = vld [vmem:[%s1360 + $0x11] sm:$0xff]
      %v1513 = vld [vmem:[%s1360 + $0x21] sm:$0xff]
      %v1514 = vld [vmem:[%s1360 + $0x31] sm:$0xff]
      %v1515 = vld [vmem:[%s1360 + $0x41] sm:$0xff]
      %v1516 = vld [vmem:[%s1360 + $0x51] sm:$0xff]
      %v1517 = vld [vmem:[%s1360 + $0x61] sm:$0xff]
      %v1518 = vld [vmem:[%s1360 + $0x71] sm:$0xff]
      %v1519 = vpack.c.bf16 %v1512, %v1511
      %v1520 = vpack.c.bf16 %v1514, %v1513
      %v1521 = vpack.c.bf16 %v1516, %v1515
      %v1522 = vpack.c.bf16 %v1518, %v1517
      %s1523 = scalar_lea.vmem %s3, 448
      %v1524 = vld [vmem:[%s1523] sm:$0xf]
      %v1525 = vld [vmem:[%s1523 + $0x4] sm:$0xf]
      %v1526 = vld [vmem:[%s1523 + $0x8] sm:$0xf]
      %v1527 = vld [vmem:[%s1523 + $0xc] sm:$0xf]
      %v1528 = vld [vmem:[%s1523 + $0x10] sm:$0xf]
      %v1529 = vld [vmem:[%s1523 + $0x14] sm:$0xf]
      %v1530 = vld [vmem:[%s1523 + $0x18] sm:$0xf]
      %v1531 = vld [vmem:[%s1523 + $0x1c] sm:$0xf]
      %v1532 = vld [vmem:[%s1523 + $0x20] sm:$0xf]
      %v1533 = vld [vmem:[%s1523 + $0x24] sm:$0xf]
      %v1534 = vld [vmem:[%s1523 + $0x28] sm:$0xf]
      %v1535 = vld [vmem:[%s1523 + $0x2c] sm:$0xf]
      %v1536 = vld [vmem:[%s1523 + $0x30] sm:$0xf]
      %v1537 = vld [vmem:[%s1523 + $0x34] sm:$0xf]
      %v1538 = vld [vmem:[%s1523 + $0x38] sm:$0xf]
      %v1539 = vld [vmem:[%s1523 + $0x3c] sm:$0xf]
      %v1556 = vunpack.c.l.b16 %v1524
      %v1557 = vunpack.c.l.b16 %v1525
      %v1558 = vunpack.c.l.b16 %v1526
      %v1559 = vunpack.c.l.b16 %v1527
      %v1560 = vunpack.c.l.b16 %v1528
      %v1561 = vunpack.c.l.b16 %v1529
      %v1562 = vunpack.c.l.b16 %v1530
      %v1563 = vunpack.c.l.b16 %v1531
      %v1564 = vunpack.c.l.b16 %v1532
      %v1565 = vunpack.c.l.b16 %v1533
      %v1566 = vunpack.c.l.b16 %v1534
      %v1567 = vunpack.c.l.b16 %v1535
      %v1568 = vunpack.c.l.b16 %v1536
      %v1569 = vunpack.c.l.b16 %v1537
      %v1570 = vunpack.c.l.b16 %v1538
      %v1571 = vunpack.c.l.b16 %v1539
      %v1572 = vpack.c.b16 %v1557, %v1556
      %v1573 = vpack.c.b16 %v1559, %v1558
      %v1574 = vpack.c.b16 %v1561, %v1560
      %v1575 = vpack.c.b16 %v1563, %v1562
      %v1576 = vpack.c.b16 %v1565, %v1564
      %v1577 = vpack.c.b16 %v1567, %v1566
      %v1578 = vpack.c.b16 %v1569, %v1568
      %v1579 = vpack.c.b16 %v1571, %v1570
      %1588 = vmatprep.subr.bf16.mxu0 0
      %1589 = vmatpush1.bf16.msra.mxu0 %v1572
      %1590 = vmatprep.subr.bf16.mxu0 0
      %1591 = vmatpush1.bf16.msra.mxu0 %v1573
      %1592 = vmatprep.subr.bf16.mxu0 0
      %1593 = vmatpush1.bf16.msra.mxu0 %v1574
      %1594 = vmatprep.subr.bf16.mxu0 0
      %1595 = vmatpush1.bf16.msra.mxu0 %v1575
      %1596 = vmatprep.subr.bf16.mxu0 0
      %1597 = vmatpush1.bf16.msra.mxu0 %v1576
      %1598 = vmatprep.subr.bf16.mxu0 0
      %1599 = vmatpush1.bf16.msra.mxu0 %v1577
      %1600 = vmatprep.subr.bf16.mxu0 0
      %1601 = vmatpush1.bf16.msra.mxu0 %v1578
      %1602 = vmatprep.subr.bf16.mxu0 0
      %1603 = vmatpush1.bf16.msra.mxu0 %v1579
      %1604 = vmatprep.subr.bf16.mxu0 0
      %1605 = vmatpush1.bf16.msra.mxu0 0
      %1606 = vmatprep.subr.bf16.mxu0 0
      %1607 = vmatpush1.bf16.msra.mxu0 0
      %1608 = vmatprep.subr.bf16.mxu0 0
      %1609 = vmatpush1.bf16.msra.mxu0 0
      %1610 = vmatprep.subr.bf16.mxu0 0
      %1611 = vmatpush1.bf16.msra.mxu0 0
      %1612 = vmatprep.subr.bf16.mxu0 0
      %1613 = vmatpush1.bf16.msra.mxu0 0
      %1614 = vmatprep.subr.bf16.mxu0 0
      %1615 = vmatpush1.bf16.msra.mxu0 0
      %1616 = vmatprep.subr.bf16.mxu0 0
      %1617 = vmatpush1.bf16.msra.mxu0 0
      %1618 = vmatprep.subr.bf16.mxu0 0
      %1619 = vmatpush1.bf16.msra.mxu0 0
      %1620 = vmatprep.mubr.bf16.mxu0 0
      %1621 = vmatmul.mubr.bf16.gmra.mrb[0].mxu0 %v1519
      %v1622 = vpop.f32.mrb[0].mxu0
      %v1623 = vadd.f32 0.0, %v1622
      %v1624 = vpop.f32.mrb[0].mxu0
      %v1625 = vpop.f32.mrb[0].mxu0
      %v1626 = vadd.f32 0.0, %v1625
      %v1627 = vpop.f32.mrb[0].mxu0
      %1628 = vmatprep.mubr.bf16.mxu0 0
      %1629 = vmatmul.mubr.bf16.gmra.mrb[0].mxu0 %v1520
      %v1630 = vpop.f32.mrb[0].mxu0
      %v1631 = vadd.f32 0.0, %v1630
      %v1632 = vpop.f32.mrb[0].mxu0
      %v1633 = vpop.f32.mrb[0].mxu0
      %v1634 = vadd.f32 0.0, %v1633
      %v1635 = vpop.f32.mrb[0].mxu0
      %1636 = vmatprep.mubr.bf16.mxu0 0
      %1637 = vmatmul.mubr.bf16.gmra.mrb[0].mxu0 %v1521
      %v1638 = vpop.f32.mrb[0].mxu0
      %v1639 = vadd.f32 0.0, %v1638
      %v1640 = vpop.f32.mrb[0].mxu0
      %v1641 = vpop.f32.mrb[0].mxu0
      %v1642 = vadd.f32 0.0, %v1641
      %v1643 = vpop.f32.mrb[0].mxu0
      %1644 = vmatprep.mubr.bf16.mxu0 0
      %1645 = vmatmul.mubr.bf16.gmra.mrb[0].mxu0 %v1522
      %v1646 = vpop.f32.mrb[0].mxu0
      %v1647 = vadd.f32 0.0, %v1646
      %v1648 = vpop.f32.mrb[0].mxu0
      %v1649 = vpop.f32.mrb[0].mxu0
      %v1650 = vadd.f32 0.0, %v1649
      %v1651 = vpop.f32.mrb[0].mxu0
      %1652 = vdwg.mxu0
      %v1653 = vadd.f32 %v1503, %v1623
      %v1654 = vadd.f32 %v1504, %v1626
      %v1655 = vadd.f32 %v1505, %v1631
      %v1656 = vadd.f32 %v1506, %v1634
      %v1657 = vadd.f32 %v1507, %v1639
      %v1658 = vadd.f32 %v1508, %v1642
      %v1659 = vadd.f32 %v1509, %v1647
      %v1660 = vadd.f32 %v1510, %v1650
      %v1661 = vld [vmem:[%s1360 + $0x2] sm:$0xff]
      %v1662 = vld [vmem:[%s1360 + $0x12] sm:$0xff]
      %v1663 = vld [vmem:[%s1360 + $0x22] sm:$0xff]
      %v1664 = vld [vmem:[%s1360 + $0x32] sm:$0xff]
      %v1665 = vld [vmem:[%s1360 + $0x42] sm:$0xff]
      %v1666 = vld [vmem:[%s1360 + $0x52] sm:$0xff]
      %v1667 = vld [vmem:[%s1360 + $0x62] sm:$0xff]
      %v1668 = vld [vmem:[%s1360 + $0x72] sm:$0xff]
      %v1669 = vpack.c.bf16 %v1662, %v1661
      %v1670 = vpack.c.bf16 %v1664, %v1663
      %v1671 = vpack.c.bf16 %v1666, %v1665
      %v1672 = vpack.c.bf16 %v1668, %v1667
      %s1673 = scalar_lea.vmem %s3, 512
      %v1674 = vld [vmem:[%s1673] sm:$0xf]
      %v1675 = vld [vmem:[%s1673 + $0x4] sm:$0xf]
      %v1676 = vld [vmem:[%s1673 + $0x8] sm:$0xf]
      %v1677 = vld [vmem:[%s1673 + $0xc] sm:$0xf]
      %v1678 = vld [vmem:[%s1673 + $0x10] sm:$0xf]
      %v1679 = vld [vmem:[%s1673 + $0x14] sm:$0xf]
      %v1680 = vld [vmem:[%s1673 + $0x18] sm:$0xf]
      %v1681 = vld [vmem:[%s1673 + $0x1c] sm:$0xf]
      %v1682 = vld [vmem:[%s1673 + $0x20] sm:$0xf]
      %v1683 = vld [vmem:[%s1673 + $0x24] sm:$0xf]
      %v1684 = vld [vmem:[%s1673 + $0x28] sm:$0xf]
      %v1685 = vld [vmem:[%s1673 + $0x2c] sm:$0xf]
      %v1686 = vld [vmem:[%s1673 + $0x30] sm:$0xf]
      %v1687 = vld [vmem:[%s1673 + $0x34] sm:$0xf]
      %v1688 = vld [vmem:[%s1673 + $0x38] sm:$0xf]
      %v1689 = vld [vmem:[%s1673 + $0x3c] sm:$0xf]
      %v1706 = vunpack.c.l.b16 %v1674
      %v1707 = vunpack.c.l.b16 %v1675
      %v1708 = vunpack.c.l.b16 %v1676
      %v1709 = vunpack.c.l.b16 %v1677
      %v1710 = vunpack.c.l.b16 %v1678
      %v1711 = vunpack.c.l.b16 %v1679
      %v1712 = vunpack.c.l.b16 %v1680
      %v1713 = vunpack.c.l.b16 %v1681
      %v1714 = vunpack.c.l.b16 %v1682
      %v1715 = vunpack.c.l.b16 %v1683
      %v1716 = vunpack.c.l.b16 %v1684
      %v1717 = vunpack.c.l.b16 %v1685
      %v1718 = vunpack.c.l.b16 %v1686
      %v1719 = vunpack.c.l.b16 %v1687
      %v1720 = vunpack.c.l.b16 %v1688
      %v1721 = vunpack.c.l.b16 %v1689
      %v1722 = vpack.c.b16 %v1707, %v1706
      %v1723 = vpack.c.b16 %v1709, %v1708
      %v1724 = vpack.c.b16 %v1711, %v1710
      %v1725 = vpack.c.b16 %v1713, %v1712
      %v1726 = vpack.c.b16 %v1715, %v1714
      %v1727 = vpack.c.b16 %v1717, %v1716
      %v1728 = vpack.c.b16 %v1719, %v1718
      %v1729 = vpack.c.b16 %v1721, %v1720
      %1738 = vmatprep.subr.bf16.mxu0 0
      %1739 = vmatpush1.bf16.msra.mxu0 %v1722
      %1740 = vmatprep.subr.bf16.mxu0 0
      %1741 = vmatpush1.bf16.msra.mxu0 %v1723
      %1742 = vmatprep.subr.bf16.mxu0 0
      %1743 = vmatpush1.bf16.msra.mxu0 %v1724
      %1744 = vmatprep.subr.bf16.mxu0 0
      %1745 = vmatpush1.bf16.msra.mxu0 %v1725
      %1746 = vmatprep.subr.bf16.mxu0 0
      %1747 = vmatpush1.bf16.msra.mxu0 %v1726
      %1748 = vmatprep.subr.bf16.mxu0 0
      %1749 = vmatpush1.bf16.msra.mxu0 %v1727
      %1750 = vmatprep.subr.bf16.mxu0 0
      %1751 = vmatpush1.bf16.msra.mxu0 %v1728
      %1752 = vmatprep.subr.bf16.mxu0 0
      %1753 = vmatpush1.bf16.msra.mxu0 %v1729
      %1754 = vmatprep.subr.bf16.mxu0 0
      %1755 = vmatpush1.bf16.msra.mxu0 0
      %1756 = vmatprep.subr.bf16.mxu0 0
      %1757 = vmatpush1.bf16.msra.mxu0 0
      %1758 = vmatprep.subr.bf16.mxu0 0
      %1759 = vmatpush1.bf16.msra.mxu0 0
      %1760 = vmatprep.subr.bf16.mxu0 0
      %1761 = vmatpush1.bf16.msra.mxu0 0
      %1762 = vmatprep.subr.bf16.mxu0 0
      %1763 = vmatpush1.bf16.msra.mxu0 0
      %1764 = vmatprep.subr.bf16.mxu0 0
      %1765 = vmatpush1.bf16.msra.mxu0 0
      %1766 = vmatprep.subr.bf16.mxu0 0
      %1767 = vmatpush1.bf16.msra.mxu0 0
      %1768 = vmatprep.subr.bf16.mxu0 0
      %1769 = vmatpush1.bf16.msra.mxu0 0
      %1770 = vmatprep.mubr.bf16.mxu0 0
      %1771 = vmatmul.mubr.bf16.gmra.mrb[0].mxu0 %v1669
      %v1772 = vpop.f32.mrb[0].mxu0
      %v1773 = vadd.f32 0.0, %v1772
      %v1774 = vpop.f32.mrb[0].mxu0
      %v1775 = vpop.f32.mrb[0].mxu0
      %v1776 = vadd.f32 0.0, %v1775
      %v1777 = vpop.f32.mrb[0].mxu0
      %1778 = vmatprep.mubr.bf16.mxu0 0
      %1779 = vmatmul.mubr.bf16.gmra.mrb[0].mxu0 %v1670
      %v1780 = vpop.f32.mrb[0].mxu0
      %v1781 = vadd.f32 0.0, %v1780
      %v1782 = vpop.f32.mrb[0].mxu0
      %v1783 = vpop.f32.mrb[0].mxu0
      %v1784 = vadd.f32 0.0, %v1783
      %v1785 = vpop.f32.mrb[0].mxu0
      %1786 = vmatprep.mubr.bf16.mxu0 0
      %1787 = vmatmul.mubr.bf16.gmra.mrb[0].mxu0 %v1671
      %v1788 = vpop.f32.mrb[0].mxu0
      %v1789 = vadd.f32 0.0, %v1788
      %v1790 = vpop.f32.mrb[0].mxu0
      %v1791 = vpop.f32.mrb[0].mxu0
      %v1792 = vadd.f32 0.0, %v1791
      %v1793 = vpop.f32.mrb[0].mxu0
      %1794 = vmatprep.mubr.bf16.mxu0 0
      %1795 = vmatmul.mubr.bf16.gmra.mrb[0].mxu0 %v1672
      %v1796 = vpop.f32.mrb[0].mxu0
      %v1797 = vadd.f32 0.0, %v1796
      %v1798 = vpop.f32.mrb[0].mxu0
      %v1799 = vpop.f32.mrb[0].mxu0
      %v1800 = vadd.f32 0.0, %v1799
      %v1801 = vpop.f32.mrb[0].mxu0
      %1802 = vdwg.mxu0
      %v1803 = vadd.f32 %v1653, %v1773
      %v1804 = vadd.f32 %v1654, %v1776
      %v1805 = vadd.f32 %v1655, %v1781
      %v1806 = vadd.f32 %v1656, %v1784
      %v1807 = vadd.f32 %v1657, %v1789
      %v1808 = vadd.f32 %v1658, %v1792
      %v1809 = vadd.f32 %v1659, %v1797
      %v1810 = vadd.f32 %v1660, %v1800
      %v1811 = vld [vmem:[%s4] sm:$0x1]
      %v1813 = vlaneseq
      %v1814 = vshrl.u32 %v1813, 7
      %v1815 = vsub.s32 0, %v1814
      %v1816 = vrot.slane %v1811, %v1815
      %v1818 = vadd.f32 %v1803, %v1816
      %v1819 = vadd.f32 %v1804, %v1816
      %v1820 = vadd.f32 %v1805, %v1816
      %v1821 = vadd.f32 %v1806, %v1816
      %v1822 = vadd.f32 %v1807, %v1816
      %v1823 = vadd.f32 %v1808, %v1816
      %v1824 = vadd.f32 %v1809, %v1816
      %v1825 = vadd.f32 %v1810, %v1816
      %1826 = vadd.xlane.f32.xlu0 %v1818
      %v1827 = vpop.xlane.xlu0 %1826
      %1828 = vadd.xlane.f32.xlu0 %v1819
      %v1829 = vpop.xlane.xlu0 %1828
      %1830 = vadd.xlane.f32.xlu0 %v1820
      %v1831 = vpop.xlane.xlu0 %1830
      %1832 = vadd.xlane.f32.xlu0 %v1821
      %v1833 = vpop.xlane.xlu0 %1832
      %1834 = vadd.xlane.f32.xlu0 %v1822
      %v1835 = vpop.xlane.xlu0 %1834
      %1836 = vadd.xlane.f32.xlu0 %v1823
      %v1837 = vpop.xlane.xlu0 %1836
      %1838 = vadd.xlane.f32.xlu0 %v1824
      %v1839 = vpop.xlane.xlu0 %1838
      %1840 = vadd.xlane.f32.xlu0 %v1825
      %v1841 = vpop.xlane.xlu0 %1840
      %v1842 = vmul.f32 %v1827, 0.03125
      %v1843 = vmul.f32 %v1829, 0.03125
      %v1844 = vmul.f32 %v1831, 0.03125
      %v1845 = vmul.f32 %v1833, 0.03125
      %v1846 = vmul.f32 %v1835, 0.03125
      %v1847 = vmul.f32 %v1837, 0.03125
      %v1848 = vmul.f32 %v1839, 0.03125
      %v1849 = vmul.f32 %v1841, 0.03125
      %v1850 = vmul.f32 %v1818, %v1818
      %v1851 = vmul.f32 %v1819, %v1819
      %v1852 = vmul.f32 %v1820, %v1820
      %v1853 = vmul.f32 %v1821, %v1821
      %v1854 = vmul.f32 %v1822, %v1822
      %v1855 = vmul.f32 %v1823, %v1823
      %v1856 = vmul.f32 %v1824, %v1824
      %v1857 = vmul.f32 %v1825, %v1825
      %1858 = vadd.xlane.f32.xlu0 %v1850
      %v1859 = vpop.xlane.xlu0 %1858
      %1860 = vadd.xlane.f32.xlu0 %v1851
      %v1861 = vpop.xlane.xlu0 %1860
      %1862 = vadd.xlane.f32.xlu0 %v1852
      %v1863 = vpop.xlane.xlu0 %1862
      %1864 = vadd.xlane.f32.xlu0 %v1853
      %v1865 = vpop.xlane.xlu0 %1864
      %1866 = vadd.xlane.f32.xlu0 %v1854
      %v1867 = vpop.xlane.xlu0 %1866
      %1868 = vadd.xlane.f32.xlu0 %v1855
      %v1869 = vpop.xlane.xlu0 %1868
      %1870 = vadd.xlane.f32.xlu0 %v1856
      %v1871 = vpop.xlane.xlu0 %1870
      %1872 = vadd.xlane.f32.xlu0 %v1857
      %v1873 = vpop.xlane.xlu0 %1872
      %v1874 = vmul.f32 %v1859, 0.03125
      %v1875 = vmul.f32 %v1861, 0.03125
      %v1876 = vmul.f32 %v1863, 0.03125
      %v1877 = vmul.f32 %v1865, 0.03125
      %v1878 = vmul.f32 %v1867, 0.03125
      %v1879 = vmul.f32 %v1869, 0.03125
      %v1880 = vmul.f32 %v1871, 0.03125
      %v1881 = vmul.f32 %v1873, 0.03125
      %v1882 = vmul.f32 %v1842, %v1842
      %v1883 = vmul.f32 %v1843, %v1843
      %v1884 = vmul.f32 %v1844, %v1844
      %v1885 = vmul.f32 %v1845, %v1845
      %v1886 = vmul.f32 %v1846, %v1846
      %v1887 = vmul.f32 %v1847, %v1847
      %v1888 = vmul.f32 %v1848, %v1848
      %v1889 = vmul.f32 %v1849, %v1849
      %v1890 = vsub.f32 %v1874, %v1882
      %v1891 = vsub.f32 %v1875, %v1883
      %v1892 = vsub.f32 %v1876, %v1884
      %v1893 = vsub.f32 %v1877, %v1885
      %v1894 = vsub.f32 %v1878, %v1886
      %v1895 = vsub.f32 %v1879, %v1887
      %v1896 = vsub.f32 %v1880, %v1888
      %v1897 = vsub.f32 %v1881, %v1889
      %v1898 = vsub.f32 %v1818, %v1842
      %v1899 = vsub.f32 %v1819, %v1843
      %v1900 = vsub.f32 %v1820, %v1844
      %v1901 = vsub.f32 %v1821, %v1845
      %v1902 = vsub.f32 %v1822, %v1846
      %v1903 = vsub.f32 %v1823, %v1847
      %v1904 = vsub.f32 %v1824, %v1848
      %v1905 = vsub.f32 %v1825, %v1849
      %v1906 = vadd.f32 %v1890, 1e-05
      %v1907 = vadd.f32 %v1891, 1e-05
      %v1908 = vadd.f32 %v1892, 1e-05
      %v1909 = vadd.f32 %v1893, 1e-05
      %v1910 = vadd.f32 %v1894, 1e-05
      %v1911 = vadd.f32 %v1895, 1e-05
      %v1912 = vadd.f32 %v1896, 1e-05
      %v1913 = vadd.f32 %v1897, 1e-05
      %v1914 = vrsqrt.pop %v1906
      %v1915 = vrsqrt.pop %v1907
      %v1916 = vrsqrt.pop %v1908
      %v1917 = vrsqrt.pop %v1909
      %v1918 = vrsqrt.pop %v1910
      %v1919 = vrsqrt.pop %v1911
      %v1920 = vrsqrt.pop %v1912
      %v1921 = vrsqrt.pop %v1913
      %v1922 = vmul.f32 %v1898, %v1914
      %v1923 = vmul.f32 %v1899, %v1915
      %v1924 = vmul.f32 %v1900, %v1916
      %v1925 = vmul.f32 %v1901, %v1917
      %v1926 = vmul.f32 %v1902, %v1918
      %v1927 = vmul.f32 %v1903, %v1919
      %v1928 = vmul.f32 %v1904, %v1920
      %v1929 = vmul.f32 %v1905, %v1921
      %v1930 = vld [vmem:[%s5] sm:$0x1]
      %v1932 = vlaneseq
      %v1933 = vshrl.u32 %v1932, 7
      %v1934 = vsub.s32 0, %v1933
      %v1935 = vrot.slane %v1930, %v1934
      %v1937 = vmul.f32 %v1922, %v1935
      %v1938 = vmul.f32 %v1923, %v1935
      %v1939 = vmul.f32 %v1924, %v1935
      %v1940 = vmul.f32 %v1925, %v1935
      %v1941 = vmul.f32 %v1926, %v1935
      %v1942 = vmul.f32 %v1927, %v1935
      %v1943 = vmul.f32 %v1928, %v1935
      %v1944 = vmul.f32 %v1929, %v1935
      %v1945 = vld [vmem:[%s6] sm:$0x1]
      %v1947 = vlaneseq
      %v1948 = vshrl.u32 %v1947, 7
      %v1949 = vsub.s32 0, %v1948
      %v1950 = vrot.slane %v1945, %v1949
      %v1952 = vadd.f32 %v1937, %v1950
      %v1953 = vadd.f32 %v1938, %v1950
      %v1954 = vadd.f32 %v1939, %v1950
      %v1955 = vadd.f32 %v1940, %v1950
      %v1956 = vadd.f32 %v1941, %v1950
      %v1957 = vadd.f32 %v1942, %v1950
      %v1958 = vadd.f32 %v1943, %v1950
      %v1959 = vadd.f32 %v1944, %v1950
      %v1960 = vxor.u32 %v1952, 2147483648
      %v1961 = vxor.u32 %v1953, 2147483648
      %v1962 = vxor.u32 %v1954, 2147483648
      %v1963 = vxor.u32 %v1955, 2147483648
      %v1964 = vxor.u32 %v1956, 2147483648
      %v1965 = vxor.u32 %v1957, 2147483648
      %v1966 = vxor.u32 %v1958, 2147483648
      %v1967 = vxor.u32 %v1959, 2147483648
      %v1968 = vmul.f32 %v1960, 1.442695
      %v1969 = vpow.pop %v1968
      %v1970 = vmul.f32 %v1961, 1.442695
      %v1971 = vpow.pop %v1970
      %v1972 = vmul.f32 %v1962, 1.442695
      %v1973 = vpow.pop %v1972
      %v1974 = vmul.f32 %v1963, 1.442695
      %v1975 = vpow.pop %v1974
      %v1976 = vmul.f32 %v1964, 1.442695
      %v1977 = vpow.pop %v1976
      %v1978 = vmul.f32 %v1965, 1.442695
      %v1979 = vpow.pop %v1978
      %v1980 = vmul.f32 %v1966, 1.442695
      %v1981 = vpow.pop %v1980
      %v1982 = vmul.f32 %v1967, 1.442695
      %v1983 = vpow.pop %v1982
      %v1984 = vadd.f32 %v1969, 1.0
      %v1985 = vadd.f32 %v1971, 1.0
      %v1986 = vadd.f32 %v1973, 1.0
      %v1987 = vadd.f32 %v1975, 1.0
      %v1988 = vadd.f32 %v1977, 1.0
      %v1989 = vadd.f32 %v1979, 1.0
      %v1990 = vadd.f32 %v1981, 1.0
      %v1991 = vadd.f32 %v1983, 1.0
      %v1992 = vrcp.pop %v1984
      %v1993 = vmul.f32 1.0, %v1992
      %v1994 = vrcp.pop %v1985
      %v1995 = vmul.f32 1.0, %v1994
      %v1996 = vrcp.pop %v1986
      %v1997 = vmul.f32 1.0, %v1996
      %v1998 = vrcp.pop %v1987
      %v1999 = vmul.f32 1.0, %v1998
      %v2000 = vrcp.pop %v1988
      %v2001 = vmul.f32 1.0, %v2000
      %v2002 = vrcp.pop %v1989
      %v2003 = vmul.f32 1.0, %v2002
      %v2004 = vrcp.pop %v1990
      %v2005 = vmul.f32 1.0, %v2004
      %v2006 = vrcp.pop %v1991
      %v2007 = vmul.f32 1.0, %v2006
      %v2008 = vmul.f32 %v1952, %v1993
      %v2009 = vmul.f32 %v1953, %v1995
      %v2010 = vmul.f32 %v1954, %v1997
      %v2011 = vmul.f32 %v1955, %v1999
      %v2012 = vmul.f32 %v1956, %v2001
      %v2013 = vmul.f32 %v1957, %v2003
      %v2014 = vmul.f32 %v1958, %v2005
      %v2015 = vmul.f32 %v1959, %v2007
      %v2016 = vadd.f32 %v418, %v2008
      %v2017 = vadd.f32 %v421, %v2009
      %v2018 = vadd.f32 %v426, %v2010
      %v2019 = vadd.f32 %v429, %v2011
      %v2020 = vadd.f32 %v434, %v2012
      %v2021 = vadd.f32 %v437, %v2013
      %v2022 = vadd.f32 %v442, %v2014
      %v2023 = vadd.f32 %v445, %v2015
      %2024 = vst [vmem:[%s278] sm:$0xff] %v2016
      %2025 = vst [vmem:[%s278 + $0x8] sm:$0xff] %v2017
      %2026 = vst [vmem:[%s278 + $0x10] sm:$0xff] %v2018
      %2027 = vst [vmem:[%s278 + $0x18] sm:$0xff] %v2019
      %2028 = vst [vmem:[%s278 + $0x20] sm:$0xff] %v2020
      %2029 = vst [vmem:[%s278 + $0x28] sm:$0xff] %v2021
      %2030 = vst [vmem:[%s278 + $0x30] sm:$0xff] %v2022
      %2031 = vst [vmem:[%s278 + $0x38] sm:$0xff] %v2023
      %p2032 = scmp.lt.s32.totalorder %s18, 1
      %s2033 = scalar_select %p2032, %s18, 1
      %s2034 = smul.addr %s2033, 8
      %s2035 = smul.addr %s2034, 8
      %s2036 = scalar_lea.vmem %s7, %s2035
      // Predicated region
      $region49: #{down_block_forward.1} parent=47 // pred_check
        %p2037 = pneg %p188
      $region50: #{down_block_forward.1} parent=47 // pred_check_branch
        %2039 = sbr.rel (%p2037) target = $region52
      $region51: #{down_block_forward.1} parent=47 // pred_region
        _
      $region52: #{down_block_forward.1} parent=47 // pred_fallthru
        _
    $region48: #{down_block_forward.1} parent=5 // pred_fallthru
      _
    %p2040 = scmp.le.s32.totalorder 2, %s13
    // Predicated region
    $region53: #{down_block_forward.1} parent=5 // pred_check
      %p2041 = pneg %p2040
    $region54: #{down_block_forward.1} parent=5 // pred_check_branch
      %2043 = sbr.rel (%p2041) target = $region56
    $region55: #{down_block_forward.1} parent=5 // pred_region
      %s2044 = ssub.s32 %s13, 2
      // Predicated region
      $region57: #{down_block_forward.1} parent=55 // pred_check
        %p2045 = pneg %p194
      $region58: #{down_block_forward.1} parent=55 // pred_check_branch
        %2047 = sbr.rel (%p2045) target = $region60
      $region59: #{down_block_forward.1} parent=55 // pred_region
        %p2048 = scmp.lt.s32.totalorder %s19, 1
        %s2049 = scalar_select %p2048, %s19, 1
        %s2050 = smul.addr %s2049, 8
        %s2051 = smul.addr %s2050, 8
        %s2052 = scalar_lea.vmem %s7, %s2051
      $region60: #{down_block_forward.1} parent=55 // pred_fallthru
        _
    $region56: #{down_block_forward.1} parent=5 // pred_fallthru
      _
  $region6: #{down_block_forward.1} parent=0 // loop_footer
    %s17 = sadd.s32 1, %s13
  $region7: #{down_block_forward.1} parent=0 // loop_footer_branch
    %12 = sbr.rel target = $region3
  $region8: #{down_block_forward.1} parent=0 // loop_exit
    _

</llo_original>
